<compile_context>
chip_gen: v7x
topology: tpu7x:2x2x1
jax: 0.10.0
libtpu: 0.0.40
codegen_flags: <defaults>
</compile_context>

<pallas_src>
import math

import jax
import jax.numpy as jnp
from jax.experimental import pallas as pl
from jax.experimental.pallas import tpu as pltpu

_PACK = 128  # original rows folded into one packed row => lane-dense T / output


def _linear_kernel(x_ref, t_ref, w_ref, s_ref, o_ref):
    # x_ref: (TILE, 128*dx) f32   128 original rows per packed row (row-major)
    # t_ref: (TILE, 128)    f32   matching T values, lane-dense
    # w_ref: (128*dx, 128)  bf16/f32 block-structured weight (constant block)
    # s_ref: (2,)           f32   SMEM scalars [w_t, bias]
    # o_ref: (TILE, 128)    f32   lane-dense outputs (full-lane stores)
    w_t = s_ref[0]
    b = s_ref[1]
    x = x_ref[...].astype(w_ref.dtype)            # VPU cast -> single MXU pass
    acc = jnp.dot(x, w_ref[...], preferred_element_type=jnp.float32)
    o_ref[...] = acc + t_ref[...] * w_t + b       # epilogue stays f32


def _vmem_capacity_bytes():
    """Physical per-core VMEM (v5e/v6e: 128 MiB, v7x: 64 MiB); safe fallback."""
    try:
        info = pltpu.get_tpu_info()
        cap = int(getattr(info, "vmem_capacity_bytes", 0))
        if cap > 0:
            return cap
    except Exception:
        pass
    return 64 * 1024 * 1024  # conservative (v7x-sized) assumption


def linear_forward(X, T, weight, bias, *, tile_rows=None, use_bf16_matmul=True):
    """Pallas equivalent of the PyTorch module's forward.

    X: (N, d-1) f32, T: (N,) f32
    weight: (1, d) f32 (torch nn.Linear layout), bias: (1,) f32
    returns: (N, 1) f32
    """
    X = X.astype(jnp.float32)
    T = T.astype(jnp.float32)
    weight = weight.astype(jnp.float32)
    bias = bias.astype(jnp.float32)

    n, dx = X.shape
    d = dx + 1
    assert weight.shape == (1, d) and bias.shape == (1,)

    w_x = weight[0, :dx]          # (dx,)
    w_t = weight[0, dx]
    b = bias[0]

    P = _PACK
    n_main = (n // P) * P
    n_tail = n - n_main

    parts = []
    if n_main:
        rows = n_main // P
        # Free row-major reshapes (zero-copy when N % 128 == 0).  For ragged N
        # only the aligned prefix is sliced; the <=127-row tail never touches
        # the kernel and the full X is never re-materialized via jnp.pad.
        X_main = X if n_tail == 0 else X[:n_main]
        T_main = T if n_tail == 0 else T[:n_main]
        Xp = X_main.reshape(rows, P * dx)
        Tp = T_main.reshape(rows, P)

        # Block-structured weight: W2[l*dx + j, l] = w_x[j], so
        #   (Xp @ W2)[r, l] = sum_j X[P*r + l, j] * w_x[j]
        # i.e. the matmul itself emits the lane-dense (rows, 128) output.
        compute_dtype = jnp.bfloat16 if use_bf16_matmul else jnp.float32
        W2 = (jnp.eye(P, dtype=jnp.float32)[:, None, :]
              * w_x[None, :, None]).reshape(P * dx, P).astype(compute_dtype)
        scal = jnp.stack([w_t, b]).astype(jnp.float32)   # SMEM scalars

        # Per-generation VMEM budget (<= 48 MiB scoped on v7x, 96 MiB on v5e/v6e).
        vmem_cap = _vmem_capacity_bytes()
        vmem_limit = int(min(max(vmem_cap - (16 << 20), 32 << 20), 96 << 20))

        if tile_rows is None:
            # Per packed row: X f32 block x2 buffers + in-kernel low-precision
            # copy of the LHS + T/out f32 blocks x2 buffers + f32 accumulator.
            bytes_per_row = (2 * P * dx * 4) + (P * dx * 2) + (2 * 2 * P * 4) + (P * 4)
            w_bytes = 2 * P * dx * P * jnp.dtype(compute_dtype).itemsize
            budget = int(0.72 * vmem_limit) - w_bytes - (1 << 20)
            tile_rows = max(8, budget // bytes_per_row)
        if tile_rows >= rows:
            tile_rows = rows                       # single full-extent block
        else:
            tile_rows = max(8, (tile_rows // 8) * 8)

        grid_n = pl.cdiv(rows, tile_rows)

        out_main = pl.pallas_call(
            _linear_kernel,
            out_shape=jax.ShapeDtypeStruct((rows, P), jnp.float32),
            grid=(grid_n,),
            in_specs=[
                pl.BlockSpec((tile_rows, P * dx), lambda i: (i, 0)),
                pl.BlockSpec((tile_rows, P), lambda i: (i, 0)),
                pl.BlockSpec((P * dx, P), lambda i: (0, 0)),
                pl.BlockSpec(memory_space=pltpu.MemorySpace.SMEM),
            ],
            out_specs=pl.BlockSpec((tile_rows, P), lambda i: (i, 0)),
            compiler_params=pltpu.CompilerParams(
                dimension_semantics=("parallel",),
                vmem_limit_bytes=vmem_limit,
            ),
            cost_estimate=pl.CostEstimate(
                flops=2 * n_main * d,
                transcendentals=0,
                bytes_accessed=(n_main * dx + 2 * n_main) * 4
                + W2.size * W2.dtype.itemsize,
            ),
        )(Xp, Tp, W2, scal)

        parts.append(out_main.reshape(-1))   # free row-major flatten -> original order

    if n_tail:
        # <= 127 ragged rows: negligible work done in plain jnp so the main
        # pass over X stays copy-free.
        y_tail = X[n_main:] @ w_x + T[n_main:] * w_t + b
        parts.append(y_tail.astype(jnp.float32))

    y = parts[0] if len(parts) == 1 else jnp.concatenate(parts)
    return y.reshape(n, 1)


def init_linear_params(key, d):
    """Matches torch.nn.Linear(d, 1) default init: U(-1/sqrt(d), 1/sqrt(d))."""
    k_w, k_b = jax.random.split(key)
    bound = 1.0 / math.sqrt(d)
    weight = jax.random.uniform(k_w, (1, d), jnp.float32, -bound, bound)
    bias = jax.random.uniform(k_b, (1,), jnp.float32, -bound, bound)
    return weight, bias


def _reference(X, T, weight, bias):
    return jnp.concatenate([X, T[:, None]], axis=1) @ weight.T + bias


if __name__ == "__main__":
    key = jax.random.PRNGKey(0)
    k1, k2, k3, k4, k5, k6, kp = jax.random.split(key, 7)

    d = 32
    weight, bias = init_linear_params(kp, d)

    # bf16 dot operands => ~1e-3-level error vs the f32 reference; tolerance is
    # deliberately relaxed for the fast path (review-sanctioned trade-off).
    tol = dict(atol=3e-2, rtol=3e-2)

    # Case 1: N multiple of 128 (zero-copy packing, single full-extent block).
    N1 = 256
    X1 = jax.random.normal(k1, (N1, d - 1), jnp.float32)
    T1 = jax.random.normal(k2, (N1,), jnp.float32)
    out1 = jax.block_until_ready(linear_forward(X1, T1, weight, bias))
    ref1 = _reference(X1, T1, weight, bias)
    assert out1.shape == (N1, 1)
    assert jnp.allclose(out1, ref1, **tol)

    # Case 2: ragged N (kernel on the 896-row aligned prefix + jnp tail).
    N2 = 1002
    X2 = jax.random.normal(k3, (N2, d - 1), jnp.float32)
    T2 = jax.random.normal(k4, (N2,), jnp.float32)
    out2 = jax.block_until_ready(linear_forward(X2, T2, weight, bias))
    ref2 = _reference(X2, T2, weight, bias)
    assert out2.shape == (N2, 1)
    assert jnp.allclose(out2, ref2, **tol)

    # Case 3: multi-step grid (tile_rows=8 over 18 packed rows -> 3 grid steps
    # with a partial last block) plus a 64-row ragged tail; also checks the
    # exact-f32 fallback path at tight tolerance.
    N3 = 2368
    X3 = jax.random.normal(k5, (N3, d - 1), jnp.float32)
    T3 = jax.random.normal(k6, (N3,), jnp.float32)
    out3 = jax.block_until_ready(
        linear_forward(X3, T3, weight, bias, tile_rows=8))
    ref3 = _reference(X3, T3, weight, bias)
    assert out3.shape == (N3, 1)
    assert jnp.allclose(out3, ref3, **tol)

    out3_f32 = jax.block_until_ready(
        linear_forward(X3, T3, weight, bias, tile_rows=8, use_bf16_matmul=False))
    assert jnp.allclose(out3_f32, ref3, atol=1e-5, rtol=1e-5)

    print("KERNEL_OK")
</pallas_src>

<mosaic_0001>
module attributes {stable_mosaic.version = 11 : i64} {
  func.func @_linear_kernel(%arg0: i32, %arg1: memref<2x3968xf32, #tpu.memory_space<vmem>>, %arg2: memref<2x128xf32, #tpu.memory_space<vmem>>, %arg3: memref<3968x128xbf16, #tpu.memory_space<vmem>>, %arg4: memref<2xf32, #tpu.memory_space<smem>>, %arg5: memref<2x128xf32, #tpu.memory_space<vmem>>) attributes {dimension_semantics = [#tpu.dimension_semantics<parallel>], iteration_bounds = array<i64: 1>, scalar_prefetch = 0 : i64, scratch_operands = 0 : i64, tpu.core_type = #tpu.core_type<tc>, window_params = [{transform_indices = @transform_0, window_bounds = array<i64: 2, 3968>}, {transform_indices = @transform_1, window_bounds = array<i64: 2, 128>}, {pipeline_mode = #tpu.pipeline_mode<synchronous>, transform_indices = @transform_2, window_bounds = array<i64: 3968, 128>}, {transform_indices = @transform_3, window_bounds = array<i64: 2>}, {transform_indices = @transform_4, window_bounds = array<i64: 2, 128>}]} {
    %c0 = arith.constant 0 : index
    %0 = memref.load %arg4[%c0] : memref<2xf32, #tpu.memory_space<smem>>
    %c1 = arith.constant 1 : index
    %1 = memref.load %arg4[%c1] : memref<2xf32, #tpu.memory_space<smem>>
    %c0_0 = arith.constant 0 : index
    %c0_1 = arith.constant 0 : index
    %2 = vector.load %arg1[%c0_0, %c0_1] : memref<2x3968xf32, #tpu.memory_space<vmem>>, vector<2x3968xf32>
    %3 = arith.truncf %2 : vector<2x3968xf32> to vector<2x3968xbf16>
    %c0_2 = arith.constant 0 : index
    %c0_3 = arith.constant 0 : index
    %4 = vector.load %arg3[%c0_2, %c0_3] : memref<3968x128xbf16, #tpu.memory_space<vmem>>, vector<3968x128xbf16>
    %cst = arith.constant dense<0.000000e+00> : vector<2x128xf32>
    %5 = tpu.matmul %3, %4, %cst {dimension_numbers = #tpu.dot_dimension_numbers<[1], [0], [0], [1], [0, 0, 1, 1], [], []>} : vector<2x3968xbf16>, vector<3968x128xbf16>, vector<2x128xf32> -> vector<2x128xf32>
    %c0_4 = arith.constant 0 : index
    %c0_5 = arith.constant 0 : index
    %6 = vector.load %arg2[%c0_4, %c0_5] : memref<2x128xf32, #tpu.memory_space<vmem>>, vector<2x128xf32>
    %7 = vector.broadcast %0 : f32 to vector<2x128xf32>
    %8 = arith.mulf %6, %7 : vector<2x128xf32>
    %9 = arith.addf %5, %8 : vector<2x128xf32>
    %10 = vector.broadcast %1 : f32 to vector<2x128xf32>
    %11 = arith.addf %9, %10 : vector<2x128xf32>
    %c0_6 = arith.constant 0 : index
    %c0_7 = arith.constant 0 : index
    %12 = vector.load %arg5[%c0_6, %c0_7] : memref<2x128xf32, #tpu.memory_space<vmem>>, vector<2x128xf32>
    tpu.vector_store %arg5[%c0_6, %c0_7], %11 {strides = array<i32>} : memref<2x128xf32, #tpu.memory_space<vmem>>, vector<2x128xf32>,
    return
  }
  func.func @transform_0(%arg0: i32) -> (i32, i32) {
    %c0_i32 = arith.constant 0 : i32
    %c0_i32_0 = arith.constant 0 : i32
    return %arg0, %c0_i32 : i32, i32
  }
  func.func @transform_1(%arg0: i32) -> (i32, i32) {
    %c0_i32 = arith.constant 0 : i32
    %c0_i32_0 = arith.constant 0 : i32
    return %arg0, %c0_i32 : i32, i32
  }
  func.func @transform_2(%arg0: i32) -> (i32, i32) {
    %c0_i32 = arith.constant 0 : i32
    %c0_i32_0 = arith.constant 0 : i32
    %c0_i32_1 = arith.constant 0 : i32
    return %c0_i32, %c0_i32_0 : i32, i32
  }
  func.func @transform_3(%arg0: i32) -> i32 {
    %c0_i32 = arith.constant 0 : i32
    %c0_i32_0 = arith.constant 0 : i32
    return %c0_i32 : i32
  }
  func.func @transform_4(%arg0: i32) -> (i32, i32) {
    %c0_i32 = arith.constant 0 : i32
    %c0_i32_0 = arith.constant 0 : i32
    return %arg0, %c0_i32 : i32, i32
  }
}

</mosaic_0001>

<llo_original>
// kernel: tpu_custom_call.1
$region0: #{tpu_custom_call.1}
  #allocation0 [shape = 'u32[]', space=smem, size = 0x4, offset = 0x4, fixed_abs, tag = 'smem constant byte address 0x4 - core index']
  #allocation1 [shape = 'u32[144,128]{1,0:T(1,128)}', space=vmem, size = 0x12000, scoped, tag = 'internal scratch']
  %s0 = inlined_call_operand.hbm [shape: f32[2,3968], index: 0, kind: input, shape index: {}]
  %s1 = inlined_call_operand.vmem [shape: f32[2,128], index: 1, kind: input, shape index: {}]
  %s2 = inlined_call_operand.hbm [shape: bf16[3968,128], index: 2, kind: input, shape index: {}]
  %s3 = inlined_call_operand.vmem [shape: f32[2], index: 3, kind: input, shape index: {}]
  %s4 = inlined_call_operand.hbm [shape: f32[2,128], index: 4, kind: output, shape index: {}]
  %s5 = sld [smem:[#allocation0]]
  $region38: #{tpu_custom_call.1} parent=0
    _
  %s7 = ssub.s32 1, %s5
  %s8 = scalar_select 0, %s7, %s5
  $region1: #{tpu_custom_call.1} parent=0
    #allocation2 [shape = 'u8[31744]{0}', space=vmem, size = 0x7c00, scoped, tag = 'input window, operand 0, single buffered']
    #allocation3 [shape = 's32[1]{0}', space=sflag, size = 0x4, scoped, tag = 'scoped memory for tpu_custom_call.1']
    #allocation4 [shape = 's32[1]{0}', space=sflag, size = 0x4, scoped, tag = 'scoped memory for tpu_custom_call.1']
    #allocation5 [shape = 's32[1]{0}', space=sflag, size = 0x4, scoped, tag = 'scoped memory for tpu_custom_call.1']
    #allocation6 [shape = 'u8[1015808]{0}', space=vmem, size = 0xf8000, scoped, tag = 'input window, operand 2, single buffered']
    #allocation7 [shape = 's32[1]{0}', space=sflag, size = 0x4, scoped, tag = 'scoped memory for tpu_custom_call.1']
    #allocation8 [shape = 'u8[512]{0}', space=smem, size = 0x200, scoped, tag = 'input window, operand 3, single buffered']
    #allocation9 [shape = 'u8[1024]{0}', space=vmem, size = 0x400, scoped, tag = 'output window, operand 0, single buffered']
    %9 = vsyncpa [#allocation3], 0
    %10 = vsyncpa [#allocation7], 0
    %11 = vsyncpa [#allocation5], 0
    %12 = vsyncpa [#allocation4], 0
    // Predicated region
    $region2: #{tpu_custom_call.1} parent=1 // pred_check
      _
    $region3: #{tpu_custom_call.1} parent=1 // pred_check_branch
      %14 = sbr.rel (0) target = $region5
    $region4: #{tpu_custom_call.1} parent=1 // pred_region
      %s16 = ssub.s32 992, 992
      %17 = vsyncadd [#allocation3], %s16
      %s19 = sshll.u32 [#allocation2], 4
      %s20 = int_to_ptr.vmem [resolvable:$true] %s19
      %22 = dma.hbm_to_vmem [thread:$0]  %s0, 992, %s20, [#allocation3]
    $region5: #{tpu_custom_call.1} parent=1 // pred_fallthru
      _
    // Predicated region
    $region6: #{tpu_custom_call.1} parent=1 // pred_check
      _
    $region7: #{tpu_custom_call.1} parent=1 // pred_check_branch
      %24 = sbr.rel (0) target = $region9
    $region8: #{tpu_custom_call.1} parent=1 // pred_region
      _
    $region9: #{tpu_custom_call.1} parent=1 // pred_fallthru
      _
    // Predicated region
    $region10: #{tpu_custom_call.1} parent=1 // pred_check
      _
    $region11: #{tpu_custom_call.1} parent=1 // pred_check_branch
      %26 = sbr.rel (0) target = $region13
    $region12: #{tpu_custom_call.1} parent=1 // pred_region
      %s28 = ssub.s32 31744, 31744
      %29 = vsyncadd [#allocation7], %s28
      %s30 = sshll.u32 [#allocation6], 4
      %s31 = int_to_ptr.vmem [resolvable:$true] %s30
      %36 = dma.hbm_to_vmem [thread:$0]  %s2, 31744, %s31, [#allocation7], 64, 64, 4
    $region13: #{tpu_custom_call.1} parent=1 // pred_fallthru
      _
    // Predicated region
    $region14: #{tpu_custom_call.1} parent=1 // pred_check
      _
    $region15: #{tpu_custom_call.1} parent=1 // pred_check_branch
      %38 = sbr.rel (0) target = $region17
    $region16: #{tpu_custom_call.1} parent=1 // pred_region
      %s40 = ssub.s32 16, 16
      %41 = vsyncadd [#allocation5], %s40
      %s43 = sshll.u32 %s3, 4
      %s44 = int_to_ptr.vmem [resolvable:$true] %s43
      %46 = dma.vmem_to_smem %s44, 16, [#allocation8], [#allocation5]
    $region17: #{tpu_custom_call.1} parent=1 // pred_fallthru
      _
    // Predicated region
    $region18: #{tpu_custom_call.1} parent=1 // pred_check
      _
    $region19: #{tpu_custom_call.1} parent=1 // pred_check_branch
      %48 = sbr.rel (0) target = $region21
    $region20: #{tpu_custom_call.1} parent=1 // pred_region
      %49 = dma.done [#allocation3], 992
    $region21: #{tpu_custom_call.1} parent=1 // pred_fallthru
      _
    // Predicated region
    $region22: #{tpu_custom_call.1} parent=1 // pred_check
      _
    $region23: #{tpu_custom_call.1} parent=1 // pred_check_branch
      %51 = sbr.rel (0) target = $region25
    $region24: #{tpu_custom_call.1} parent=1 // pred_region
      %52 = dma.done [#allocation7], 31744
    $region25: #{tpu_custom_call.1} parent=1 // pred_fallthru
      _
    // Predicated region
    $region26: #{tpu_custom_call.1} parent=1 // pred_check
      _
    $region27: #{tpu_custom_call.1} parent=1 // pred_check_branch
      %54 = sbr.rel (0) target = $region29
    $region28: #{tpu_custom_call.1} parent=1 // pred_region
      %55 = dma.done [#allocation5], 16
    $region29: #{tpu_custom_call.1} parent=1 // pred_fallthru
      _
    %56 = sfence
    %s58 = sld [smem:[#allocation8]]
    %s59 = sld [smem:[#allocation8 + $0x1]]
    %v60 = vld [vmem:[#allocation2] sm:$0xff]
    %v61 = vld [vmem:[#allocation2 + $0x8] sm:$0xff]
    %v62 = vld [vmem:[#allocation2 + $0x10] sm:$0xff]
    %v63 = vld [vmem:[#allocation2 + $0x18] sm:$0xff]
    %v64 = vld [vmem:[#allocation2 + $0x20] sm:$0xff]
    %v65 = vld [vmem:[#allocation2 + $0x28] sm:$0xff]
    %v66 = vld [vmem:[#allocation2 + $0x30] sm:$0xff]
    %v67 = vld [vmem:[#allocation2 + $0x38] sm:$0x3f]
    %v76 = vcombine.high %v60, %v60
    %v78 = vunpack.c.l.s4 1983009808
    %v79 = vunpack.c.0.s8 %v78
    %v80 = vlaneseq
    %v81 = vshrl.u32 %v80, 7
    %v82 = vsub.s32 %v79, %v81
    %v83 = vrot.slane %v60, %v82
    %v85 = vunpack.c.l.s4 1983009808
    %v86 = vunpack.c.0.s8 %v85
    %v87 = vlaneseq
    %v88 = vshrl.u32 %v87, 7
    %v89 = vsub.s32 %v86, %v88
    %v90 = vrot.slane %v76, %v89
    %v91 = vcombine.high %v83, %v83
    %v92 = vcombine.high %v90, %v90
    %v93 = vcombine.high %v61, %v61
    %v95 = vunpack.c.l.s4 1983009808
    %v96 = vunpack.c.0.s8 %v95
    %v97 = vlaneseq
    %v98 = vshrl.u32 %v97, 7
    %v99 = vsub.s32 %v96, %v98
    %v100 = vrot.slane %v61, %v99
    %v102 = vunpack.c.l.s4 1983009808
    %v103 = vunpack.c.0.s8 %v102
    %v104 = vlaneseq
    %v105 = vshrl.u32 %v104, 7
    %v106 = vsub.s32 %v103, %v105
    %v107 = vrot.slane %v93, %v106
    %v108 = vcombine.high %v100, %v100
    %v109 = vcombine.high %v107, %v107
    %v110 = vcombine.high %v62, %v62
    %v112 = vunpack.c.l.s4 1983009808
    %v113 = vunpack.c.0.s8 %v112
    %v114 = vlaneseq
    %v115 = vshrl.u32 %v114, 7
    %v116 = vsub.s32 %v113, %v115
    %v117 = vrot.slane %v62, %v116
    %v119 = vunpack.c.l.s4 1983009808
    %v120 = vunpack.c.0.s8 %v119
    %v121 = vlaneseq
    %v122 = vshrl.u32 %v121, 7
    %v123 = vsub.s32 %v120, %v122
    %v124 = vrot.slane %v110, %v123
    %v125 = vcombine.high %v117, %v117
    %v126 = vcombine.high %v124, %v124
    %v127 = vcombine.high %v63, %v63
    %v129 = vunpack.c.l.s4 1983009808
    %v130 = vunpack.c.0.s8 %v129
    %v131 = vlaneseq
    %v132 = vshrl.u32 %v131, 7
    %v133 = vsub.s32 %v130, %v132
    %v134 = vrot.slane %v63, %v133
    %v136 = vunpack.c.l.s4 1983009808
    %v137 = vunpack.c.0.s8 %v136
    %v138 = vlaneseq
    %v139 = vshrl.u32 %v138, 7
    %v140 = vsub.s32 %v137, %v139
    %v141 = vrot.slane %v127, %v140
    %v142 = vcombine.high %v134, %v134
    %v143 = vcombine.high %v141, %v141
    %v144 = vcombine.high %v64, %v64
    %v146 = vunpack.c.l.s4 1983009808
    %v147 = vunpack.c.0.s8 %v146
    %v148 = vlaneseq
    %v149 = vshrl.u32 %v148, 7
    %v150 = vsub.s32 %v147, %v149
    %v151 = vrot.slane %v64, %v150
    %v153 = vunpack.c.l.s4 1983009808
    %v154 = vunpack.c.0.s8 %v153
    %v155 = vlaneseq
    %v156 = vshrl.u32 %v155, 7
    %v157 = vsub.s32 %v154, %v156
    %v158 = vrot.slane %v144, %v157
    %v159 = vcombine.high %v151, %v151
    %v160 = vcombine.high %v158, %v158
    %v161 = vcombine.high %v65, %v65
    %v163 = vunpack.c.l.s4 1983009808
    %v164 = vunpack.c.0.s8 %v163
    %v165 = vlaneseq
    %v166 = vshrl.u32 %v165, 7
    %v167 = vsub.s32 %v164, %v166
    %v168 = vrot.slane %v65, %v167
    %v170 = vunpack.c.l.s4 1983009808
    %v171 = vunpack.c.0.s8 %v170
    %v172 = vlaneseq
    %v173 = vshrl.u32 %v172, 7
    %v174 = vsub.s32 %v171, %v173
    %v175 = vrot.slane %v161, %v174
    %v176 = vcombine.high %v168, %v168
    %v177 = vcombine.high %v175, %v175
    %v178 = vcombine.high %v66, %v66
    %v180 = vunpack.c.l.s4 1983009808
    %v181 = vunpack.c.0.s8 %v180
    %v182 = vlaneseq
    %v183 = vshrl.u32 %v182, 7
    %v184 = vsub.s32 %v181, %v183
    %v185 = vrot.slane %v66, %v184
    %v187 = vunpack.c.l.s4 1983009808
    %v188 = vunpack.c.0.s8 %v187
    %v189 = vlaneseq
    %v190 = vshrl.u32 %v189, 7
    %v191 = vsub.s32 %v188, %v190
    %v192 = vrot.slane %v178, %v191
    %v193 = vcombine.high %v185, %v185
    %v194 = vcombine.high %v192, %v192
    %v195 = vcombine.high %v67, %v67
    %v197 = vunpack.c.l.s4 1983009808
    %v198 = vunpack.c.0.s8 %v197
    %v199 = vlaneseq
    %v200 = vshrl.u32 %v199, 7
    %v201 = vsub.s32 %v198, %v200
    %v202 = vrot.slane %v67, %v201
    %v204 = vunpack.c.l.s4 1983009808
    %v205 = vunpack.c.0.s8 %v204
    %v206 = vlaneseq
    %v207 = vshrl.u32 %v206, 7
    %v208 = vsub.s32 %v205, %v207
    %v209 = vrot.slane %v195, %v208
    %v210 = vcombine.high %v202, %v202
    %v242 = vpack.c.bf16 %v83, %v83
    %v243 = vpack.c.bf16 %v91, %v91
    %v244 = vpack.c.bf16 %v90, %v90
    %v245 = vpack.c.bf16 %v92, %v92
    %v246 = vpack.c.bf16 %v100, %v100
    %v247 = vpack.c.bf16 %v108, %v108
    %v248 = vpack.c.bf16 %v107, %v107
    %v249 = vpack.c.bf16 %v109, %v109
    %v250 = vpack.c.bf16 %v117, %v117
    %v251 = vpack.c.bf16 %v125, %v125
    %v252 = vpack.c.bf16 %v124, %v124
    %v253 = vpack.c.bf16 %v126, %v126
    %v254 = vpack.c.bf16 %v134, %v134
    %v255 = vpack.c.bf16 %v142, %v142
    %v256 = vpack.c.bf16 %v141, %v141
    %v257 = vpack.c.bf16 %v143, %v143
    %v258 = vpack.c.bf16 %v151, %v151
    %v259 = vpack.c.bf16 %v159, %v159
    %v260 = vpack.c.bf16 %v158, %v158
    %v261 = vpack.c.bf16 %v160, %v160
    %v262 = vpack.c.bf16 %v168, %v168
    %v263 = vpack.c.bf16 %v176, %v176
    %v264 = vpack.c.bf16 %v175, %v175
    %v265 = vpack.c.bf16 %v177, %v177
    %v266 = vpack.c.bf16 %v185, %v185
    %v267 = vpack.c.bf16 %v193, %v193
    %v268 = vpack.c.bf16 %v192, %v192
    %v269 = vpack.c.bf16 %v194, %v194
    %v270 = vpack.c.bf16 %v202, %v202
    %v271 = vpack.c.bf16 %v210, %v210
    %v272 = vpack.c.bf16 %v209, %v209
    %v273 = vld [vmem:[#allocation6] sm:$0xf]
    %v274 = vld [vmem:[#allocation6 + $0x4] sm:$0xf]
    %v275 = vld [vmem:[#allocation6 + $0x8] sm:$0xf]
    %v276 = vld [vmem:[#allocation6 + $0xc] sm:$0xf]
    %v277 = vld [vmem:[#allocation6 + $0x10] sm:$0xf]
    %v278 = vld [vmem:[#allocation6 + $0x14] sm:$0xf]
    %v279 = vld [vmem:[#allocation6 + $0x18] sm:$0xf]
    %v280 = vld [vmem:[#allocation6 + $0x1c] sm:$0xf]
    %v281 = vld [vmem:[#allocation6 + $0x20] sm:$0xf]
    %v282 = vld [vmem:[#allocation6 + $0x24] sm:$0xf]
    %v283 = vld [vmem:[#allocation6 + $0x28] sm:$0xf]
    %v284 = vld [vmem:[#allocation6 + $0x2c] sm:$0xf]
    %v285 = vld [vmem:[#allocation6 + $0x30] sm:$0xf]
    %v286 = vld [vmem:[#allocation6 + $0x34] sm:$0xf]
    %v287 = vld [vmem:[#allocation6 + $0x38] sm:$0xf]
    %v288 = vld [vmem:[#allocation6 + $0x3c] sm:$0xf]
    %v289 = vld [vmem:[#allocation6 + $0x40] sm:$0xf]
    %v290 = vld [vmem:[#allocation6 + $0x44] sm:$0xf]
    %v291 = vld [vmem:[#allocation6 + $0x48] sm:$0xf]
    %v292 = vld [vmem:[#allocation6 + $0x4c] sm:$0xf]
    %v293 = vld [vmem:[#allocation6 + $0x50] sm:$0xf]
    %v294 = vld [vmem:[#allocation6 + $0x54] sm:$0xf]
    %v295 = vld [vmem:[#allocation6 + $0x58] sm:$0xf]
    %v296 = vld [vmem:[#allocation6 + $0x5c] sm:$0xf]
    %v297 = vld [vmem:[#allocation6 + $0x60] sm:$0xf]
    %v298 = vld [vmem:[#allocation6 + $0x64] sm:$0xf]
    %v299 = vld [vmem:[#allocation6 + $0x68] sm:$0xf]
    %v300 = vld [vmem:[#allocation6 + $0x6c] sm:$0xf]
    %v301 = vld [vmem:[#allocation6 + $0x70] sm:$0xf]
    %v302 = vld [vmem:[#allocation6 + $0x74] sm:$0xf]
    %v303 = vld [vmem:[#allocation6 + $0x78] sm:$0xf]
    %v304 = vld [vmem:[#allocation6 + $0x7c] sm:$0xf]
    %v305 = vld [vmem:[#allocation6 + $0x80] sm:$0xf]
    %v306 = vld [vmem:[#allocation6 + $0x84] sm:$0xf]
    %v307 = vld [vmem:[#allocation6 + $0x88] sm:$0xf]
    %v308 = vld [vmem:[#allocation6 + $0x8c] sm:$0xf]
    %v309 = vld [vmem:[#allocation6 + $0x90] sm:$0xf]
    %v310 = vld [vmem:[#allocation6 + $0x94] sm:$0xf]
    %v311 = vld [vmem:[#allocation6 + $0x98] sm:$0xf]
    %v312 = vld [vmem:[#allocation6 + $0x9c] sm:$0xf]
    %v313 = vld [vmem:[#allocation6 + $0xa0] sm:$0xf]
    %v314 = vld [vmem:[#allocation6 + $0xa4] sm:$0xf]
    %v315 = vld [vmem:[#allocation6 + $0xa8] sm:$0xf]
    %v316 = vld [vmem:[#allocation6 + $0xac] sm:$0xf]
    %v317 = vld [vmem:[#allocation6 + $0xb0] sm:$0xf]
    %v318 = vld [vmem:[#allocation6 + $0xb4] sm:$0xf]
    %v319 = vld [vmem:[#allocation6 + $0xb8] sm:$0xf]
    %v320 = vld [vmem:[#allocation6 + $0xbc] sm:$0xf]
    %v321 = vld [vmem:[#allocation6 + $0xc0] sm:$0xf]
    %v322 = vld [vmem:[#allocation6 + $0xc4] sm:$0xf]
    %v323 = vld [vmem:[#allocation6 + $0xc8] sm:$0xf]
    %v324 = vld [vmem:[#allocation6 + $0xcc] sm:$0xf]
    %v325 = vld [vmem:[#allocation6 + $0xd0] sm:$0xf]
    %v326 = vld [vmem:[#allocation6 + $0xd4] sm:$0xf]
    %v327 = vld [vmem:[#allocation6 + $0xd8] sm:$0xf]
    %v328 = vld [vmem:[#allocation6 + $0xdc] sm:$0xf]
    %v329 = vld [vmem:[#allocation6 + $0xe0] sm:$0xf]
    %v330 = vld [vmem:[#allocation6 + $0xe4] sm:$0xf]
    %v331 = vld [vmem:[#allocation6 + $0xe8] sm:$0xf]
    %v332 = vld [vmem:[#allocation6 + $0xec] sm:$0xf]
    %v333 = vld [vmem:[#allocation6 + $0xf0] sm:$0xf]
    %v334 = vld [vmem:[#allocation6 + $0xf4] sm:$0xf]
    %v335 = vld [vmem:[#allocation6 + $0xf8] sm:$0xf]
    %v336 = vld [vmem:[#allocation6 + $0xfc] sm:$0xf]
    %v337 = vld [vmem:[#allocation6 + $0x100] sm:$0xf]
    %v338 = vld [vmem:[#allocation6 + $0x104] sm:$0xf]
    %v339 = vld [vmem:[#allocation6 + $0x108] sm:$0xf]
    %v340 = vld [vmem:[#allocation6 + $0x10c] sm:$0xf]
    %v341 = vld [vmem:[#allocation6 + $0x110] sm:$0xf]
    %v342 = vld [vmem:[#allocation6 + $0x114] sm:$0xf]
    %v343 = vld [vmem:[#allocation6 + $0x118] sm:$0xf]
    %v344 = vld [vmem:[#allocation6 + $0x11c] sm:$0xf]
    %v345 = vld [vmem:[#allocation6 + $0x120] sm:$0xf]
    %v346 = vld [vmem:[#allocation6 + $0x124] sm:$0xf]
    %v347 = vld [vmem:[#allocation6 + $0x128] sm:$0xf]
    %v348 = vld [vmem:[#allocation6 + $0x12c] sm:$0xf]
    %v349 = vld [vmem:[#allocation6 + $0x130] sm:$0xf]
    %v350 = vld [vmem:[#allocation6 + $0x134] sm:$0xf]
    %v351 = vld [vmem:[#allocation6 + $0x138] sm:$0xf]
    %v352 = vld [vmem:[#allocation6 + $0x13c] sm:$0xf]
    %v353 = vld [vmem:[#allocation6 + $0x140] sm:$0xf]
    %v354 = vld [vmem:[#allocation6 + $0x144] sm:$0xf]
    %v355 = vld [vmem:[#allocation6 + $0x148] sm:$0xf]
    %v356 = vld [vmem:[#allocation6 + $0x14c] sm:$0xf]
    %v357 = vld [vmem:[#allocation6 + $0x150] sm:$0xf]
    %v358 = vld [vmem:[#allocation6 + $0x154] sm:$0xf]
    %v359 = vld [vmem:[#allocation6 + $0x158] sm:$0xf]
    %v360 = vld [vmem:[#allocation6 + $0x15c] sm:$0xf]
    %v361 = vld [vmem:[#allocation6 + $0x160] sm:$0xf]
    %v362 = vld [vmem:[#allocation6 + $0x164] sm:$0xf]
    %v363 = vld [vmem:[#allocation6 + $0x168] sm:$0xf]
    %v364 = vld [vmem:[#allocation6 + $0x16c] sm:$0xf]
    %v365 = vld [vmem:[#allocation6 + $0x170] sm:$0xf]
    %v366 = vld [vmem:[#allocation6 + $0x174] sm:$0xf]
    %v367 = vld [vmem:[#allocation6 + $0x178] sm:$0xf]
    %v368 = vld [vmem:[#allocation6 + $0x17c] sm:$0xf]
    %v369 = vld [vmem:[#allocation6 + $0x180] sm:$0xf]
    %v370 = vld [vmem:[#allocation6 + $0x184] sm:$0xf]
    %v371 = vld [vmem:[#allocation6 + $0x188] sm:$0xf]
    %v372 = vld [vmem:[#allocation6 + $0x18c] sm:$0xf]
    %v373 = vld [vmem:[#allocation6 + $0x190] sm:$0xf]
    %v374 = vld [vmem:[#allocation6 + $0x194] sm:$0xf]
    %v375 = vld [vmem:[#allocation6 + $0x198] sm:$0xf]
    %v376 = vld [vmem:[#allocation6 + $0x19c] sm:$0xf]
    %v377 = vld [vmem:[#allocation6 + $0x1a0] sm:$0xf]
    %v378 = vld [vmem:[#allocation6 + $0x1a4] sm:$0xf]
    %v379 = vld [vmem:[#allocation6 + $0x1a8] sm:$0xf]
    %v380 = vld [vmem:[#allocation6 + $0x1ac] sm:$0xf]
    %v381 = vld [vmem:[#allocation6 + $0x1b0] sm:$0xf]
    %v382 = vld [vmem:[#allocation6 + $0x1b4] sm:$0xf]
    %v383 = vld [vmem:[#allocation6 + $0x1b8] sm:$0xf]
    %v384 = vld [vmem:[#allocation6 + $0x1bc] sm:$0xf]
    %v385 = vld [vmem:[#allocation6 + $0x1c0] sm:$0xf]
    %v386 = vld [vmem:[#allocation6 + $0x1c4] sm:$0xf]
    %v387 = vld [vmem:[#allocation6 + $0x1c8] sm:$0xf]
    %v388 = vld [vmem:[#allocation6 + $0x1cc] sm:$0xf]
    %v389 = vld [vmem:[#allocation6 + $0x1d0] sm:$0xf]
    %v390 = vld [vmem:[#allocation6 + $0x1d4] sm:$0xf]
    %v391 = vld [vmem:[#allocation6 + $0x1d8] sm:$0xf]
    %v392 = vld [vmem:[#allocation6 + $0x1dc] sm:$0xf]
    %v393 = vld [vmem:[#allocation6 + $0x1e0] sm:$0xf]
    %v394 = vld [vmem:[#allocation6 + $0x1e4] sm:$0xf]
    %v395 = vld [vmem:[#allocation6 + $0x1e8] sm:$0xf]
    %v396 = vld [vmem:[#allocation6 + $0x1ec] sm:$0xf]
    %v397 = vld [vmem:[#allocation6 + $0x1f0] sm:$0xf]
    %v398 = vld [vmem:[#allocation6 + $0x1f4] sm:$0xf]
    %v399 = vld [vmem:[#allocation6 + $0x1f8] sm:$0xf]
    %v400 = vld [vmem:[#allocation6 + $0x1fc] sm:$0xf]
    %v401 = vld [vmem:[#allocation6 + $0x200] sm:$0xf]
    %v402 = vld [vmem:[#allocation6 + $0x204] sm:$0xf]
    %v403 = vld [vmem:[#allocation6 + $0x208] sm:$0xf]
    %v404 = vld [vmem:[#allocation6 + $0x20c] sm:$0xf]
    %v405 = vld [vmem:[#allocation6 + $0x210] sm:$0xf]
    %v406 = vld [vmem:[#allocation6 + $0x214] sm:$0xf]
    %v407 = vld [vmem:[#allocation6 + $0x218] sm:$0xf]
    %v408 = vld [vmem:[#allocation6 + $0x21c] sm:$0xf]
    %v409 = vld [vmem:[#allocation6 + $0x220] sm:$0xf]
    %v410 = vld [vmem:[#allocation6 + $0x224] sm:$0xf]
    %v411 = vld [vmem:[#allocation6 + $0x228] sm:$0xf]
    %v412 = vld [vmem:[#allocation6 + $0x22c] sm:$0xf]
    %v413 = vld [vmem:[#allocation6 + $0x230] sm:$0xf]
    %v414 = vld [vmem:[#allocation6 + $0x234] sm:$0xf]
    %v415 = vld [vmem:[#allocation6 + $0x238] sm:$0xf]
    %v416 = vld [vmem:[#allocation6 + $0x23c] sm:$0xf]
    %v417 = vld [vmem:[#allocation6 + $0x240] sm:$0xf]
    %v418 = vld [vmem:[#allocation6 + $0x244] sm:$0xf]
    %v419 = vld [vmem:[#allocation6 + $0x248] sm:$0xf]
    %v420 = vld [vmem:[#allocation6 + $0x24c] sm:$0xf]
    %v421 = vld [vmem:[#allocation6 + $0x250] sm:$0xf]
    %v422 = vld [vmem:[#allocation6 + $0x254] sm:$0xf]
    %v423 = vld [vmem:[#allocation6 + $0x258] sm:$0xf]
    %v424 = vld [vmem:[#allocation6 + $0x25c] sm:$0xf]
    %v425 = vld [vmem:[#allocation6 + $0x260] sm:$0xf]
    %v426 = vld [vmem:[#allocation6 + $0x264] sm:$0xf]
    %v427 = vld [vmem:[#allocation6 + $0x268] sm:$0xf]
    %v428 = vld [vmem:[#allocation6 + $0x26c] sm:$0xf]
    %v429 = vld [vmem:[#allocation6 + $0x270] sm:$0xf]
    %v430 = vld [vmem:[#allocation6 + $0x274] sm:$0xf]
    %v431 = vld [vmem:[#allocation6 + $0x278] sm:$0xf]
    %v432 = vld [vmem:[#allocation6 + $0x27c] sm:$0xf]
    %v433 = vld [vmem:[#allocation6 + $0x280] sm:$0xf]
    %v434 = vld [vmem:[#allocation6 + $0x284] sm:$0xf]
    %v435 = vld [vmem:[#allocation6 + $0x288] sm:$0xf]
    %v436 = vld [vmem:[#allocation6 + $0x28c] sm:$0xf]
    %v437 = vld [vmem:[#allocation6 + $0x290] sm:$0xf]
    %v438 = vld [vmem:[#allocation6 + $0x294] sm:$0xf]
    %v439 = vld [vmem:[#allocation6 + $0x298] sm:$0xf]
    %v440 = vld [vmem:[#allocation6 + $0x29c] sm:$0xf]
    %v441 = vld [vmem:[#allocation6 + $0x2a0] sm:$0xf]
    %v442 = vld [vmem:[#allocation6 + $0x2a4] sm:$0xf]
    %v443 = vld [vmem:[#allocation6 + $0x2a8] sm:$0xf]
    %v444 = vld [vmem:[#allocation6 + $0x2ac] sm:$0xf]
    %v445 = vld [vmem:[#allocation6 + $0x2b0] sm:$0xf]
    %v446 = vld [vmem:[#allocation6 + $0x2b4] sm:$0xf]
    %v447 = vld [vmem:[#allocation6 + $0x2b8] sm:$0xf]
    %v448 = vld [vmem:[#allocation6 + $0x2bc] sm:$0xf]
    %v449 = vld [vmem:[#allocation6 + $0x2c0] sm:$0xf]
    %v450 = vld [vmem:[#allocation6 + $0x2c4] sm:$0xf]
    %v451 = vld [vmem:[#allocation6 + $0x2c8] sm:$0xf]
    %v452 = vld [vmem:[#allocation6 + $0x2cc] sm:$0xf]
    %v453 = vld [vmem:[#allocation6 + $0x2d0] sm:$0xf]
    %v454 = vld [vmem:[#allocation6 + $0x2d4] sm:$0xf]
    %v455 = vld [vmem:[#allocation6 + $0x2d8] sm:$0xf]
    %v456 = vld [vmem:[#allocation6 + $0x2dc] sm:$0xf]
    %v457 = vld [vmem:[#allocation6 + $0x2e0] sm:$0xf]
    %v458 = vld [vmem:[#allocation6 + $0x2e4] sm:$0xf]
    %v459 = vld [vmem:[#allocation6 + $0x2e8] sm:$0xf]
    %v460 = vld [vmem:[#allocation6 + $0x2ec] sm:$0xf]
    %v461 = vld [vmem:[#allocation6 + $0x2f0] sm:$0xf]
    %v462 = vld [vmem:[#allocation6 + $0x2f4] sm:$0xf]
    %v463 = vld [vmem:[#allocation6 + $0x2f8] sm:$0xf]
    %v464 = vld [vmem:[#allocation6 + $0x2fc] sm:$0xf]
    %v465 = vld [vmem:[#allocation6 + $0x300] sm:$0xf]
    %v466 = vld [vmem:[#allocation6 + $0x304] sm:$0xf]
    %v467 = vld [vmem:[#allocation6 + $0x308] sm:$0xf]
    %v468 = vld [vmem:[#allocation6 + $0x30c] sm:$0xf]
    %v469 = vld [vmem:[#allocation6 + $0x310] sm:$0xf]
    %v470 = vld [vmem:[#allocation6 + $0x314] sm:$0xf]
    %v471 = vld [vmem:[#allocation6 + $0x318] sm:$0xf]
    %v472 = vld [vmem:[#allocation6 + $0x31c] sm:$0xf]
    %v473 = vld [vmem:[#allocation6 + $0x320] sm:$0xf]
    %v474 = vld [vmem:[#allocation6 + $0x324] sm:$0xf]
    %v475 = vld [vmem:[#allocation6 + $0x328] sm:$0xf]
    %v476 = vld [vmem:[#allocation6 + $0x32c] sm:$0xf]
    %v477 = vld [vmem:[#allocation6 + $0x330] sm:$0xf]
    %v478 = vld [vmem:[#allocation6 + $0x334] sm:$0xf]
    %v479 = vld [vmem:[#allocation6 + $0x338] sm:$0xf]
    %v480 = vld [vmem:[#allocation6 + $0x33c] sm:$0xf]
    %v481 = vld [vmem:[#allocation6 + $0x340] sm:$0xf]
    %v482 = vld [vmem:[#allocation6 + $0x344] sm:$0xf]
    %v483 = vld [vmem:[#allocation6 + $0x348] sm:$0xf]
    %v484 = vld [vmem:[#allocation6 + $0x34c] sm:$0xf]
    %v485 = vld [vmem:[#allocation6 + $0x350] sm:$0xf]
    %v486 = vld [vmem:[#allocation6 + $0x354] sm:$0xf]
    %v487 = vld [vmem:[#allocation6 + $0x358] sm:$0xf]
    %v488 = vld [vmem:[#allocation6 + $0x35c] sm:$0xf]
    %v489 = vld [vmem:[#allocation6 + $0x360] sm:$0xf]
    %v490 = vld [vmem:[#allocation6 + $0x364] sm:$0xf]
    %v491 = vld [vmem:[#allocation6 + $0x368] sm:$0xf]
    %v492 = vld [vmem:[#allocation6 + $0x36c] sm:$0xf]
    %v493 = vld [vmem:[#allocation6 + $0x370] sm:$0xf]
    %v494 = vld [vmem:[#allocation6 + $0x374] sm:$0xf]
    %v495 = vld [vmem:[#allocation6 + $0x378] sm:$0xf]
    %v496 = vld [vmem:[#allocation6 + $0x37c] sm:$0xf]
    %v497 = vld [vmem:[#allocation6 + $0x380] sm:$0xf]
    %v498 = vld [vmem:[#allocation6 + $0x384] sm:$0xf]
    %v499 = vld [vmem:[#allocation6 + $0x388] sm:$0xf]
    %v500 = vld [vmem:[#allocation6 + $0x38c] sm:$0xf]
    %v501 = vld [vmem:[#allocation6 + $0x390] sm:$0xf]
    %v502 = vld [vmem:[#allocation6 + $0x394] sm:$0xf]
    %v503 = vld [vmem:[#allocation6 + $0x398] sm:$0xf]
    %v504 = vld [vmem:[#allocation6 + $0x39c] sm:$0xf]
    %v505 = vld [vmem:[#allocation6 + $0x3a0] sm:$0xf]
    %v506 = vld [vmem:[#allocation6 + $0x3a4] sm:$0xf]
    %v507 = vld [vmem:[#allocation6 + $0x3a8] sm:$0xf]
    %v508 = vld [vmem:[#allocation6 + $0x3ac] sm:$0xf]
    %v509 = vld [vmem:[#allocation6 + $0x3b0] sm:$0xf]
    %v510 = vld [vmem:[#allocation6 + $0x3b4] sm:$0xf]
    %v511 = vld [vmem:[#allocation6 + $0x3b8] sm:$0xf]
    %v512 = vld [vmem:[#allocation6 + $0x3bc] sm:$0xf]
    %v513 = vld [vmem:[#allocation6 + $0x3c0] sm:$0xf]
    %v514 = vld [vmem:[#allocation6 + $0x3c4] sm:$0xf]
    %v515 = vld [vmem:[#allocation6 + $0x3c8] sm:$0xf]
    %v516 = vld [vmem:[#allocation6 + $0x3cc] sm:$0xf]
    %v517 = vld [vmem:[#allocation6 + $0x3d0] sm:$0xf]
    %v518 = vld [vmem:[#allocation6 + $0x3d4] sm:$0xf]
    %v519 = vld [vmem:[#allocation6 + $0x3d8] sm:$0xf]
    %v520 = vld [vmem:[#allocation6 + $0x3dc] sm:$0xf]
    %v521 = vld [vmem:[#allocation6 + $0x3e0] sm:$0xf]
    %v522 = vld [vmem:[#allocation6 + $0x3e4] sm:$0xf]
    %v523 = vld [vmem:[#allocation6 + $0x3e8] sm:$0xf]
    %v524 = vld [vmem:[#allocation6 + $0x3ec] sm:$0xf]
    %v525 = vld [vmem:[#allocation6 + $0x3f0] sm:$0xf]
    %v526 = vld [vmem:[#allocation6 + $0x3f4] sm:$0xf]
    %v527 = vld [vmem:[#allocation6 + $0x3f8] sm:$0xf]
    %v528 = vld [vmem:[#allocation6 + $0x3fc] sm:$0xf]
    %v529 = vld [vmem:[#allocation6 + $0x400] sm:$0xf]
    %v530 = vld [vmem:[#allocation6 + $0x404] sm:$0xf]
    %v531 = vld [vmem:[#allocation6 + $0x408] sm:$0xf]
    %v532 = vld [vmem:[#allocation6 + $0x40c] sm:$0xf]
    %v533 = vld [vmem:[#allocation6 + $0x410] sm:$0xf]
    %v534 = vld [vmem:[#allocation6 + $0x414] sm:$0xf]
    %v535 = vld [vmem:[#allocation6 + $0x418] sm:$0xf]
    %v536 = vld [vmem:[#allocation6 + $0x41c] sm:$0xf]
    %v537 = vld [vmem:[#allocation6 + $0x420] sm:$0xf]
    %v538 = vld [vmem:[#allocation6 + $0x424] sm:$0xf]
    %v539 = vld [vmem:[#allocation6 + $0x428] sm:$0xf]
    %v540 = vld [vmem:[#allocation6 + $0x42c] sm:$0xf]
    %v541 = vld [vmem:[#allocation6 + $0x430] sm:$0xf]
    %v542 = vld [vmem:[#allocation6 + $0x434] sm:$0xf]
    %v543 = vld [vmem:[#allocation6 + $0x438] sm:$0xf]
    %v544 = vld [vmem:[#allocation6 + $0x43c] sm:$0xf]
    %v545 = vld [vmem:[#allocation6 + $0x440] sm:$0xf]
    %v546 = vld [vmem:[#allocation6 + $0x444] sm:$0xf]
    %v547 = vld [vmem:[#allocation6 + $0x448] sm:$0xf]
    %v548 = vld [vmem:[#allocation6 + $0x44c] sm:$0xf]
    %v549 = vld [vmem:[#allocation6 + $0x450] sm:$0xf]
    %v550 = vld [vmem:[#allocation6 + $0x454] sm:$0xf]
    %v551 = vld [vmem:[#allocation6 + $0x458] sm:$0xf]
    %v552 = vld [vmem:[#allocation6 + $0x45c] sm:$0xf]
    %v553 = vld [vmem:[#allocation6 + $0x460] sm:$0xf]
    %v554 = vld [vmem:[#allocation6 + $0x464] sm:$0xf]
    %v555 = vld [vmem:[#allocation6 + $0x468] sm:$0xf]
    %v556 = vld [vmem:[#allocation6 + $0x46c] sm:$0xf]
    %v557 = vld [vmem:[#allocation6 + $0x470] sm:$0xf]
    %v558 = vld [vmem:[#allocation6 + $0x474] sm:$0xf]
    %v559 = vld [vmem:[#allocation6 + $0x478] sm:$0xf]
    %v560 = vld [vmem:[#allocation6 + $0x47c] sm:$0xf]
    %v561 = vld [vmem:[#allocation6 + $0x480] sm:$0xf]
    %v562 = vld [vmem:[#allocation6 + $0x484] sm:$0xf]
    %v563 = vld [vmem:[#allocation6 + $0x488] sm:$0xf]
    %v564 = vld [vmem:[#allocation6 + $0x48c] sm:$0xf]
    %v565 = vld [vmem:[#allocation6 + $0x490] sm:$0xf]
    %v566 = vld [vmem:[#allocation6 + $0x494] sm:$0xf]
    %v567 = vld [vmem:[#allocation6 + $0x498] sm:$0xf]
    %v568 = vld [vmem:[#allocation6 + $0x49c] sm:$0xf]
    %v569 = vld [vmem:[#allocation6 + $0x4a0] sm:$0xf]
    %v570 = vld [vmem:[#allocation6 + $0x4a4] sm:$0xf]
    %v571 = vld [vmem:[#allocation6 + $0x4a8] sm:$0xf]
    %v572 = vld [vmem:[#allocation6 + $0x4ac] sm:$0xf]
    %v573 = vld [vmem:[#allocation6 + $0x4b0] sm:$0xf]
    %v574 = vld [vmem:[#allocation6 + $0x4b4] sm:$0xf]
    %v575 = vld [vmem:[#allocation6 + $0x4b8] sm:$0xf]
    %v576 = vld [vmem:[#allocation6 + $0x4bc] sm:$0xf]
    %v577 = vld [vmem:[#allocation6 + $0x4c0] sm:$0xf]
    %v578 = vld [vmem:[#allocation6 + $0x4c4] sm:$0xf]
    %v579 = vld [vmem:[#allocation6 + $0x4c8] sm:$0xf]
    %v580 = vld [vmem:[#allocation6 + $0x4cc] sm:$0xf]
    %v581 = vld [vmem:[#allocation6 + $0x4d0] sm:$0xf]
    %v582 = vld [vmem:[#allocation6 + $0x4d4] sm:$0xf]
    %v583 = vld [vmem:[#allocation6 + $0x4d8] sm:$0xf]
    %v584 = vld [vmem:[#allocation6 + $0x4dc] sm:$0xf]
    %v585 = vld [vmem:[#allocation6 + $0x4e0] sm:$0xf]
    %v586 = vld [vmem:[#allocation6 + $0x4e4] sm:$0xf]
    %v587 = vld [vmem:[#allocation6 + $0x4e8] sm:$0xf]
    %v588 = vld [vmem:[#allocation6 + $0x4ec] sm:$0xf]
    %v589 = vld [vmem:[#allocation6 + $0x4f0] sm:$0xf]
    %v590 = vld [vmem:[#allocation6 + $0x4f4] sm:$0xf]
    %v591 = vld [vmem:[#allocation6 + $0x4f8] sm:$0xf]
    %v592 = vld [vmem:[#allocation6 + $0x4fc] sm:$0xf]
    %v593 = vld [vmem:[#allocation6 + $0x500] sm:$0xf]
    %v594 = vld [vmem:[#allocation6 + $0x504] sm:$0xf]
    %v595 = vld [vmem:[#allocation6 + $0x508] sm:$0xf]
    %v596 = vld [vmem:[#allocation6 + $0x50c] sm:$0xf]
    %v597 = vld [vmem:[#allocation6 + $0x510] sm:$0xf]
    %v598 = vld [vmem:[#allocation6 + $0x514] sm:$0xf]
    %v599 = vld [vmem:[#allocation6 + $0x518] sm:$0xf]
    %v600 = vld [vmem:[#allocation6 + $0x51c] sm:$0xf]
    %v601 = vld [vmem:[#allocation6 + $0x520] sm:$0xf]
    %v602 = vld [vmem:[#allocation6 + $0x524] sm:$0xf]
    %v603 = vld [vmem:[#allocation6 + $0x528] sm:$0xf]
    %v604 = vld [vmem:[#allocation6 + $0x52c] sm:$0xf]
    %v605 = vld [vmem:[#allocation6 + $0x530] sm:$0xf]
    %v606 = vld [vmem:[#allocation6 + $0x534] sm:$0xf]
    %v607 = vld [vmem:[#allocation6 + $0x538] sm:$0xf]
    %v608 = vld [vmem:[#allocation6 + $0x53c] sm:$0xf]
    %v609 = vld [vmem:[#allocation6 + $0x540] sm:$0xf]
    %v610 = vld [vmem:[#allocation6 + $0x544] sm:$0xf]
    %v611 = vld [vmem:[#allocation6 + $0x548] sm:$0xf]
    %v612 = vld [vmem:[#allocation6 + $0x54c] sm:$0xf]
    %v613 = vld [vmem:[#allocation6 + $0x550] sm:$0xf]
    %v614 = vld [vmem:[#allocation6 + $0x554] sm:$0xf]
    %v615 = vld [vmem:[#allocation6 + $0x558] sm:$0xf]
    %v616 = vld [vmem:[#allocation6 + $0x55c] sm:$0xf]
    %v617 = vld [vmem:[#allocation6 + $0x560] sm:$0xf]
    %v618 = vld [vmem:[#allocation6 + $0x564] sm:$0xf]
    %v619 = vld [vmem:[#allocation6 + $0x568] sm:$0xf]
    %v620 = vld [vmem:[#allocation6 + $0x56c] sm:$0xf]
    %v621 = vld [vmem:[#allocation6 + $0x570] sm:$0xf]
    %v622 = vld [vmem:[#allocation6 + $0x574] sm:$0xf]
    %v623 = vld [vmem:[#allocation6 + $0x578] sm:$0xf]
    %v624 = vld [vmem:[#allocation6 + $0x57c] sm:$0xf]
    %v625 = vld [vmem:[#allocation6 + $0x580] sm:$0xf]
    %v626 = vld [vmem:[#allocation6 + $0x584] sm:$0xf]
    %v627 = vld [vmem:[#allocation6 + $0x588] sm:$0xf]
    %v628 = vld [vmem:[#allocation6 + $0x58c] sm:$0xf]
    %v629 = vld [vmem:[#allocation6 + $0x590] sm:$0xf]
    %v630 = vld [vmem:[#allocation6 + $0x594] sm:$0xf]
    %v631 = vld [vmem:[#allocation6 + $0x598] sm:$0xf]
    %v632 = vld [vmem:[#allocation6 + $0x59c] sm:$0xf]
    %v633 = vld [vmem:[#allocation6 + $0x5a0] sm:$0xf]
    %v634 = vld [vmem:[#allocation6 + $0x5a4] sm:$0xf]
    %v635 = vld [vmem:[#allocation6 + $0x5a8] sm:$0xf]
    %v636 = vld [vmem:[#allocation6 + $0x5ac] sm:$0xf]
    %v637 = vld [vmem:[#allocation6 + $0x5b0] sm:$0xf]
    %v638 = vld [vmem:[#allocation6 + $0x5b4] sm:$0xf]
    %v639 = vld [vmem:[#allocation6 + $0x5b8] sm:$0xf]
    %v640 = vld [vmem:[#allocation6 + $0x5bc] sm:$0xf]
    %v641 = vld [vmem:[#allocation6 + $0x5c0] sm:$0xf]
    %v642 = vld [vmem:[#allocation6 + $0x5c4] sm:$0xf]
    %v643 = vld [vmem:[#allocation6 + $0x5c8] sm:$0xf]
    %v644 = vld [vmem:[#allocation6 + $0x5cc] sm:$0xf]
    %v645 = vld [vmem:[#allocation6 + $0x5d0] sm:$0xf]
    %v646 = vld [vmem:[#allocation6 + $0x5d4] sm:$0xf]
    %v647 = vld [vmem:[#allocation6 + $0x5d8] sm:$0xf]
    %v648 = vld [vmem:[#allocation6 + $0x5dc] sm:$0xf]
    %v649 = vld [vmem:[#allocation6 + $0x5e0] sm:$0xf]
    %v650 = vld [vmem:[#allocation6 + $0x5e4] sm:$0xf]
    %v651 = vld [vmem:[#allocation6 + $0x5e8] sm:$0xf]
    %v652 = vld [vmem:[#allocation6 + $0x5ec] sm:$0xf]
    %v653 = vld [vmem:[#allocation6 + $0x5f0] sm:$0xf]
    %v654 = vld [vmem:[#allocation6 + $0x5f4] sm:$0xf]
    %v655 = vld [vmem:[#allocation6 + $0x5f8] sm:$0xf]
    %v656 = vld [vmem:[#allocation6 + $0x5fc] sm:$0xf]
    %v657 = vld [vmem:[#allocation6 + $0x600] sm:$0xf]
    %v658 = vld [vmem:[#allocation6 + $0x604] sm:$0xf]
    %v659 = vld [vmem:[#allocation6 + $0x608] sm:$0xf]
    %v660 = vld [vmem:[#allocation6 + $0x60c] sm:$0xf]
    %v661 = vld [vmem:[#allocation6 + $0x610] sm:$0xf]
    %v662 = vld [vmem:[#allocation6 + $0x614] sm:$0xf]
    %v663 = vld [vmem:[#allocation6 + $0x618] sm:$0xf]
    %v664 = vld [vmem:[#allocation6 + $0x61c] sm:$0xf]
    %v665 = vld [vmem:[#allocation6 + $0x620] sm:$0xf]
    %v666 = vld [vmem:[#allocation6 + $0x624] sm:$0xf]
    %v667 = vld [vmem:[#allocation6 + $0x628] sm:$0xf]
    %v668 = vld [vmem:[#allocation6 + $0x62c] sm:$0xf]
    %v669 = vld [vmem:[#allocation6 + $0x630] sm:$0xf]
    %v670 = vld [vmem:[#allocation6 + $0x634] sm:$0xf]
    %v671 = vld [vmem:[#allocation6 + $0x638] sm:$0xf]
    %v672 = vld [vmem:[#allocation6 + $0x63c] sm:$0xf]
    %v673 = vld [vmem:[#allocation6 + $0x640] sm:$0xf]
    %v674 = vld [vmem:[#allocation6 + $0x644] sm:$0xf]
    %v675 = vld [vmem:[#allocation6 + $0x648] sm:$0xf]
    %v676 = vld [vmem:[#allocation6 + $0x64c] sm:$0xf]
    %v677 = vld [vmem:[#allocation6 + $0x650] sm:$0xf]
    %v678 = vld [vmem:[#allocation6 + $0x654] sm:$0xf]
    %v679 = vld [vmem:[#allocation6 + $0x658] sm:$0xf]
    %v680 = vld [vmem:[#allocation6 + $0x65c] sm:$0xf]
    %v681 = vld [vmem:[#allocation6 + $0x660] sm:$0xf]
    %v682 = vld [vmem:[#allocation6 + $0x664] sm:$0xf]
    %v683 = vld [vmem:[#allocation6 + $0x668] sm:$0xf]
    %v684 = vld [vmem:[#allocation6 + $0x66c] sm:$0xf]
    %v685 = vld [vmem:[#allocation6 + $0x670] sm:$0xf]
    %v686 = vld [vmem:[#allocation6 + $0x674] sm:$0xf]
    %v687 = vld [vmem:[#allocation6 + $0x678] sm:$0xf]
    %v688 = vld [vmem:[#allocation6 + $0x67c] sm:$0xf]
    %v689 = vld [vmem:[#allocation6 + $0x680] sm:$0xf]
    %v690 = vld [vmem:[#allocation6 + $0x684] sm:$0xf]
    %v691 = vld [vmem:[#allocation6 + $0x688] sm:$0xf]
    %v692 = vld [vmem:[#allocation6 + $0x68c] sm:$0xf]
    %v693 = vld [vmem:[#allocation6 + $0x690] sm:$0xf]
    %v694 = vld [vmem:[#allocation6 + $0x694] sm:$0xf]
    %v695 = vld [vmem:[#allocation6 + $0x698] sm:$0xf]
    %v696 = vld [vmem:[#allocation6 + $0x69c] sm:$0xf]
    %v697 = vld [vmem:[#allocation6 + $0x6a0] sm:$0xf]
    %v698 = vld [vmem:[#allocation6 + $0x6a4] sm:$0xf]
    %v699 = vld [vmem:[#allocation6 + $0x6a8] sm:$0xf]
    %v700 = vld [vmem:[#allocation6 + $0x6ac] sm:$0xf]
    %v701 = vld [vmem:[#allocation6 + $0x6b0] sm:$0xf]
    %v702 = vld [vmem:[#allocation6 + $0x6b4] sm:$0xf]
    %v703 = vld [vmem:[#allocation6 + $0x6b8] sm:$0xf]
    %v704 = vld [vmem:[#allocation6 + $0x6bc] sm:$0xf]
    %v705 = vld [vmem:[#allocation6 + $0x6c0] sm:$0xf]
    %v706 = vld [vmem:[#allocation6 + $0x6c4] sm:$0xf]
    %v707 = vld [vmem:[#allocation6 + $0x6c8] sm:$0xf]
    %v708 = vld [vmem:[#allocation6 + $0x6cc] sm:$0xf]
    %v709 = vld [vmem:[#allocation6 + $0x6d0] sm:$0xf]
    %v710 = vld [vmem:[#allocation6 + $0x6d4] sm:$0xf]
    %v711 = vld [vmem:[#allocation6 + $0x6d8] sm:$0xf]
    %v712 = vld [vmem:[#allocation6 + $0x6dc] sm:$0xf]
    %v713 = vld [vmem:[#allocation6 + $0x6e0] sm:$0xf]
    %v714 = vld [vmem:[#allocation6 + $0x6e4] sm:$0xf]
    %v715 = vld [vmem:[#allocation6 + $0x6e8] sm:$0xf]
    %v716 = vld [vmem:[#allocation6 + $0x6ec] sm:$0xf]
    %v717 = vld [vmem:[#allocation6 + $0x6f0] sm:$0xf]
    %v718 = vld [vmem:[#allocation6 + $0x6f4] sm:$0xf]
    %v719 = vld [vmem:[#allocation6 + $0x6f8] sm:$0xf]
    %v720 = vld [vmem:[#allocation6 + $0x6fc] sm:$0xf]
    %v721 = vld [vmem:[#allocation6 + $0x700] sm:$0xf]
    %v722 = vld [vmem:[#allocation6 + $0x704] sm:$0xf]
    %v723 = vld [vmem:[#allocation6 + $0x708] sm:$0xf]
    %v724 = vld [vmem:[#allocation6 + $0x70c] sm:$0xf]
    %v725 = vld [vmem:[#allocation6 + $0x710] sm:$0xf]
    %v726 = vld [vmem:[#allocation6 + $0x714] sm:$0xf]
    %v727 = vld [vmem:[#allocation6 + $0x718] sm:$0xf]
    %v728 = vld [vmem:[#allocation6 + $0x71c] sm:$0xf]
    %v729 = vld [vmem:[#allocation6 + $0x720] sm:$0xf]
    %v730 = vld [vmem:[#allocation6 + $0x724] sm:$0xf]
    %v731 = vld [vmem:[#allocation6 + $0x728] sm:$0xf]
    %v732 = vld [vmem:[#allocation6 + $0x72c] sm:$0xf]
    %v733 = vld [vmem:[#allocation6 + $0x730] sm:$0xf]
    %v734 = vld [vmem:[#allocation6 + $0x734] sm:$0xf]
    %v735 = vld [vmem:[#allocation6 + $0x738] sm:$0xf]
    %v736 = vld [vmem:[#allocation6 + $0x73c] sm:$0xf]
    %v737 = vld [vmem:[#allocation6 + $0x740] sm:$0xf]
    %v738 = vld [vmem:[#allocation6 + $0x744] sm:$0xf]
    %v739 = vld [vmem:[#allocation6 + $0x748] sm:$0xf]
    %v740 = vld [vmem:[#allocation6 + $0x74c] sm:$0xf]
    %v741 = vld [vmem:[#allocation6 + $0x750] sm:$0xf]
    %v742 = vld [vmem:[#allocation6 + $0x754] sm:$0xf]
    %v743 = vld [vmem:[#allocation6 + $0x758] sm:$0xf]
    %v744 = vld [vmem:[#allocation6 + $0x75c] sm:$0xf]
    %v745 = vld [vmem:[#allocation6 + $0x760] sm:$0xf]
    %v746 = vld [vmem:[#allocation6 + $0x764] sm:$0xf]
    %v747 = vld [vmem:[#allocation6 + $0x768] sm:$0xf]
    %v748 = vld [vmem:[#allocation6 + $0x76c] sm:$0xf]
    %v749 = vld [vmem:[#allocation6 + $0x770] sm:$0xf]
    %v750 = vld [vmem:[#allocation6 + $0x774] sm:$0xf]
    %v751 = vld [vmem:[#allocation6 + $0x778] sm:$0xf]
    %v752 = vld [vmem:[#allocation6 + $0x77c] sm:$0xf]
    %v753 = vld [vmem:[#allocation6 + $0x780] sm:$0xf]
    %v754 = vld [vmem:[#allocation6 + $0x784] sm:$0xf]
    %v755 = vld [vmem:[#allocation6 + $0x788] sm:$0xf]
    %v756 = vld [vmem:[#allocation6 + $0x78c] sm:$0xf]
    %v757 = vld [vmem:[#allocation6 + $0x790] sm:$0xf]
    %v758 = vld [vmem:[#allocation6 + $0x794] sm:$0xf]
    %v759 = vld [vmem:[#allocation6 + $0x798] sm:$0xf]
    %v760 = vld [vmem:[#allocation6 + $0x79c] sm:$0xf]
    %v761 = vld [vmem:[#allocation6 + $0x7a0] sm:$0xf]
    %v762 = vld [vmem:[#allocation6 + $0x7a4] sm:$0xf]
    %v763 = vld [vmem:[#allocation6 + $0x7a8] sm:$0xf]
    %v764 = vld [vmem:[#allocation6 + $0x7ac] sm:$0xf]
    %v765 = vld [vmem:[#allocation6 + $0x7b0] sm:$0xf]
    %v766 = vld [vmem:[#allocation6 + $0x7b4] sm:$0xf]
    %v767 = vld [vmem:[#allocation6 + $0x7b8] sm:$0xf]
    %v768 = vld [vmem:[#allocation6 + $0x7bc] sm:$0xf]
    %v769 = vld [vmem:[%s1] sm:$0x3]
    %v770 = vstv %s58
    %v771 = vmul.f32 %v769, %v770
    %v1268 = vunpack.c.l.b16 %v273
    %v1269 = vunpack.c.l.b16 %v274
    %v1270 = vunpack.c.l.b16 %v275
    %v1271 = vunpack.c.l.b16 %v276
    %v1272 = vunpack.c.l.b16 %v277
    %v1273 = vunpack.c.l.b16 %v278
    %v1274 = vunpack.c.l.b16 %v279
    %v1275 = vunpack.c.l.b16 %v280
    %v1276 = vunpack.c.l.b16 %v281
    %v1277 = vunpack.c.l.b16 %v282
    %v1278 = vunpack.c.l.b16 %v283
    %v1279 = vunpack.c.l.b16 %v284
    %v1280 = vunpack.c.l.b16 %v285
    %v1281 = vunpack.c.l.b16 %v286
    %v1282 = vunpack.c.l.b16 %v287
    %v1283 = vunpack.c.l.b16 %v288
    %v1284 = vunpack.c.l.b16 %v289
    %v1285 = vunpack.c.l.b16 %v290
    %v1286 = vunpack.c.l.b16 %v291
    %v1287 = vunpack.c.l.b16 %v292
    %v1288 = vunpack.c.l.b16 %v293
    %v1289 = vunpack.c.l.b16 %v294
    %v1290 = vunpack.c.l.b16 %v295
    %v1291 = vunpack.c.l.b16 %v296
    %v1292 = vunpack.c.l.b16 %v297
    %v1293 = vunpack.c.l.b16 %v298
    %v1294 = vunpack.c.l.b16 %v299
    %v1295 = vunpack.c.l.b16 %v300
    %v1296 = vunpack.c.l.b16 %v301
    %v1297 = vunpack.c.l.b16 %v302
    %v1298 = vunpack.c.l.b16 %v303
    %v1299 = vunpack.c.l.b16 %v304
    %v1300 = vunpack.c.l.b16 %v305
    %v1301 = vunpack.c.l.b16 %v306
    %v1302 = vunpack.c.l.b16 %v307
    %v1303 = vunpack.c.l.b16 %v308
    %v1304 = vunpack.c.l.b16 %v309
    %v1305 = vunpack.c.l.b16 %v310
    %v1306 = vunpack.c.l.b16 %v311
    %v1307 = vunpack.c.l.b16 %v312
    %v1308 = vunpack.c.l.b16 %v313
    %v1309 = vunpack.c.l.b16 %v314
    %v1310 = vunpack.c.l.b16 %v315
    %v1311 = vunpack.c.l.b16 %v316
    %v1312 = vunpack.c.l.b16 %v317
    %v1313 = vunpack.c.l.b16 %v318
    %v1314 = vunpack.c.l.b16 %v319
    %v1315 = vunpack.c.l.b16 %v320
    %v1316 = vunpack.c.l.b16 %v321
    %v1317 = vunpack.c.l.b16 %v322
    %v1318 = vunpack.c.l.b16 %v323
    %v1319 = vunpack.c.l.b16 %v324
    %v1320 = vunpack.c.l.b16 %v325
    %v1321 = vunpack.c.l.b16 %v326
    %v1322 = vunpack.c.l.b16 %v327
    %v1323 = vunpack.c.l.b16 %v328
    %v1324 = vunpack.c.l.b16 %v329
    %v1325 = vunpack.c.l.b16 %v330
    %v1326 = vunpack.c.l.b16 %v331
    %v1327 = vunpack.c.l.b16 %v332
    %v1328 = vunpack.c.l.b16 %v333
    %v1329 = vunpack.c.l.b16 %v334
    %v1330 = vunpack.c.l.b16 %v335
    %v1331 = vunpack.c.l.b16 %v336
    %v1332 = vunpack.c.l.b16 %v337
    %v1333 = vunpack.c.l.b16 %v338
    %v1334 = vunpack.c.l.b16 %v339
    %v1335 = vunpack.c.l.b16 %v340
    %v1336 = vunpack.c.l.b16 %v341
    %v1337 = vunpack.c.l.b16 %v342
    %v1338 = vunpack.c.l.b16 %v343
    %v1339 = vunpack.c.l.b16 %v344
    %v1340 = vunpack.c.l.b16 %v345
    %v1341 = vunpack.c.l.b16 %v346
    %v1342 = vunpack.c.l.b16 %v347
    %v1343 = vunpack.c.l.b16 %v348
    %v1344 = vunpack.c.l.b16 %v349
    %v1345 = vunpack.c.l.b16 %v350
    %v1346 = vunpack.c.l.b16 %v351
    %v1347 = vunpack.c.l.b16 %v352
    %v1348 = vunpack.c.l.b16 %v353
    %v1349 = vunpack.c.l.b16 %v354
    %v1350 = vunpack.c.l.b16 %v355
    %v1351 = vunpack.c.l.b16 %v356
    %v1352 = vunpack.c.l.b16 %v357
    %v1353 = vunpack.c.l.b16 %v358
    %v1354 = vunpack.c.l.b16 %v359
    %v1355 = vunpack.c.l.b16 %v360
    %v1356 = vunpack.c.l.b16 %v361
    %v1357 = vunpack.c.l.b16 %v362
    %v1358 = vunpack.c.l.b16 %v363
    %v1359 = vunpack.c.l.b16 %v364
    %v1360 = vunpack.c.l.b16 %v365
    %v1361 = vunpack.c.l.b16 %v366
    %v1362 = vunpack.c.l.b16 %v367
    %v1363 = vunpack.c.l.b16 %v368
    %v1364 = vunpack.c.l.b16 %v369
    %v1365 = vunpack.c.l.b16 %v370
    %v1366 = vunpack.c.l.b16 %v371
    %v1367 = vunpack.c.l.b16 %v372
    %v1368 = vunpack.c.l.b16 %v373
    %v1369 = vunpack.c.l.b16 %v374
    %v1370 = vunpack.c.l.b16 %v375
    %v1371 = vunpack.c.l.b16 %v376
    %v1372 = vunpack.c.l.b16 %v377
    %v1373 = vunpack.c.l.b16 %v378
    %v1374 = vunpack.c.l.b16 %v379
    %v1375 = vunpack.c.l.b16 %v380
    %v1376 = vunpack.c.l.b16 %v381
    %v1377 = vunpack.c.l.b16 %v382
    %v1378 = vunpack.c.l.b16 %v383
    %v1379 = vunpack.c.l.b16 %v384
    %v1380 = vunpack.c.l.b16 %v385
    %v1381 = vunpack.c.l.b16 %v386
    %v1382 = vunpack.c.l.b16 %v387
    %v1383 = vunpack.c.l.b16 %v388
    %v1384 = vunpack.c.l.b16 %v389
    %v1385 = vunpack.c.l.b16 %v390
    %v1386 = vunpack.c.l.b16 %v391
    %v1387 = vunpack.c.l.b16 %v392
    %v1388 = vunpack.c.l.b16 %v393
    %v1389 = vunpack.c.l.b16 %v394
    %v1390 = vunpack.c.l.b16 %v395
    %v1391 = vunpack.c.l.b16 %v396
    %v1392 = vunpack.c.l.b16 %v397
    %v1393 = vunpack.c.l.b16 %v398
    %v1394 = vunpack.c.l.b16 %v399
    %v1395 = vunpack.c.l.b16 %v400
    %v1396 = vunpack.c.l.b16 %v401
    %v1397 = vunpack.c.l.b16 %v402
    %v1398 = vunpack.c.l.b16 %v403
    %v1399 = vunpack.c.l.b16 %v404
    %v1400 = vunpack.c.l.b16 %v405
    %v1401 = vunpack.c.l.b16 %v406
    %v1402 = vunpack.c.l.b16 %v407
    %v1403 = vunpack.c.l.b16 %v408
    %v1404 = vunpack.c.l.b16 %v409
    %v1405 = vunpack.c.l.b16 %v410
    %v1406 = vunpack.c.l.b16 %v411
    %v1407 = vunpack.c.l.b16 %v412
    %v1408 = vunpack.c.l.b16 %v413
    %v1409 = vunpack.c.l.b16 %v414
    %v1410 = vunpack.c.l.b16 %v415
    %v1411 = vunpack.c.l.b16 %v416
    %v1412 = vunpack.c.l.b16 %v417
    %v1413 = vunpack.c.l.b16 %v418
    %v1414 = vunpack.c.l.b16 %v419
    %v1415 = vunpack.c.l.b16 %v420
    %v1416 = vunpack.c.l.b16 %v421
    %v1417 = vunpack.c.l.b16 %v422
    %v1418 = vunpack.c.l.b16 %v423
    %v1419 = vunpack.c.l.b16 %v424
    %v1420 = vunpack.c.l.b16 %v425
    %v1421 = vunpack.c.l.b16 %v426
    %v1422 = vunpack.c.l.b16 %v427
    %v1423 = vunpack.c.l.b16 %v428
    %v1424 = vunpack.c.l.b16 %v429
    %v1425 = vunpack.c.l.b16 %v430
    %v1426 = vunpack.c.l.b16 %v431
    %v1427 = vunpack.c.l.b16 %v432
    %v1428 = vunpack.c.l.b16 %v433
    %v1429 = vunpack.c.l.b16 %v434
    %v1430 = vunpack.c.l.b16 %v435
    %v1431 = vunpack.c.l.b16 %v436
    %v1432 = vunpack.c.l.b16 %v437
    %v1433 = vunpack.c.l.b16 %v438
    %v1434 = vunpack.c.l.b16 %v439
    %v1435 = vunpack.c.l.b16 %v440
    %v1436 = vunpack.c.l.b16 %v441
    %v1437 = vunpack.c.l.b16 %v442
    %v1438 = vunpack.c.l.b16 %v443
    %v1439 = vunpack.c.l.b16 %v444
    %v1440 = vunpack.c.l.b16 %v445
    %v1441 = vunpack.c.l.b16 %v446
    %v1442 = vunpack.c.l.b16 %v447
    %v1443 = vunpack.c.l.b16 %v448
    %v1444 = vunpack.c.l.b16 %v449
    %v1445 = vunpack.c.l.b16 %v450
    %v1446 = vunpack.c.l.b16 %v451
    %v1447 = vunpack.c.l.b16 %v452
    %v1448 = vunpack.c.l.b16 %v453
    %v1449 = vunpack.c.l.b16 %v454
    %v1450 = vunpack.c.l.b16 %v455
    %v1451 = vunpack.c.l.b16 %v456
    %v1452 = vunpack.c.l.b16 %v457
    %v1453 = vunpack.c.l.b16 %v458
    %v1454 = vunpack.c.l.b16 %v459
    %v1455 = vunpack.c.l.b16 %v460
    %v1456 = vunpack.c.l.b16 %v461
    %v1457 = vunpack.c.l.b16 %v462
    %v1458 = vunpack.c.l.b16 %v463
    %v1459 = vunpack.c.l.b16 %v464
    %v1460 = vunpack.c.l.b16 %v465
    %v1461 = vunpack.c.l.b16 %v466
    %v1462 = vunpack.c.l.b16 %v467
    %v1463 = vunpack.c.l.b16 %v468
    %v1464 = vunpack.c.l.b16 %v469
    %v1465 = vunpack.c.l.b16 %v470
    %v1466 = vunpack.c.l.b16 %v471
    %v1467 = vunpack.c.l.b16 %v472
    %v1468 = vunpack.c.l.b16 %v473
    %v1469 = vunpack.c.l.b16 %v474
    %v1470 = vunpack.c.l.b16 %v475
    %v1471 = vunpack.c.l.b16 %v476
    %v1472 = vunpack.c.l.b16 %v477
    %v1473 = vunpack.c.l.b16 %v478
    %v1474 = vunpack.c.l.b16 %v479
    %v1475 = vunpack.c.l.b16 %v480
    %v1476 = vunpack.c.l.b16 %v481
    %v1477 = vunpack.c.l.b16 %v482
    %v1478 = vunpack.c.l.b16 %v483
    %v1479 = vunpack.c.l.b16 %v484
    %v1480 = vunpack.c.l.b16 %v485
    %v1481 = vunpack.c.l.b16 %v486
    %v1482 = vunpack.c.l.b16 %v487
    %v1483 = vunpack.c.l.b16 %v488
    %v1484 = vunpack.c.l.b16 %v489
    %v1485 = vunpack.c.l.b16 %v490
    %v1486 = vunpack.c.l.b16 %v491
    %v1487 = vunpack.c.l.b16 %v492
    %v1488 = vunpack.c.l.b16 %v493
    %v1489 = vunpack.c.l.b16 %v494
    %v1490 = vunpack.c.l.b16 %v495
    %v1491 = vunpack.c.l.b16 %v496
    %v1492 = vunpack.c.l.b16 %v497
    %v1493 = vunpack.c.l.b16 %v498
    %v1494 = vunpack.c.l.b16 %v499
    %v1495 = vunpack.c.l.b16 %v500
    %v1496 = vunpack.c.l.b16 %v501
    %v1497 = vunpack.c.l.b16 %v502
    %v1498 = vunpack.c.l.b16 %v503
    %v1499 = vunpack.c.l.b16 %v504
    %v1500 = vunpack.c.l.b16 %v505
    %v1501 = vunpack.c.l.b16 %v506
    %v1502 = vunpack.c.l.b16 %v507
    %v1503 = vunpack.c.l.b16 %v508
    %v1504 = vunpack.c.l.b16 %v509
    %v1505 = vunpack.c.l.b16 %v510
    %v1506 = vunpack.c.l.b16 %v511
    %v1507 = vunpack.c.l.b16 %v512
    %v1508 = vunpack.c.l.b16 %v513
    %v1509 = vunpack.c.l.b16 %v514
    %v1510 = vunpack.c.l.b16 %v515
    %v1511 = vunpack.c.l.b16 %v516
    %v1512 = vunpack.c.l.b16 %v517
    %v1513 = vunpack.c.l.b16 %v518
    %v1514 = vunpack.c.l.b16 %v519
    %v1515 = vunpack.c.l.b16 %v520
    %v1516 = vunpack.c.l.b16 %v521
    %v1517 = vunpack.c.l.b16 %v522
    %v1518 = vunpack.c.l.b16 %v523
    %v1519 = vunpack.c.l.b16 %v524
    %v1520 = vunpack.c.l.b16 %v525
    %v1521 = vunpack.c.l.b16 %v526
    %v1522 = vunpack.c.l.b16 %v527
    %v1523 = vunpack.c.l.b16 %v528
    %v1524 = vunpack.c.l.b16 %v529
    %v1525 = vunpack.c.l.b16 %v530
    %v1526 = vunpack.c.l.b16 %v531
    %v1527 = vunpack.c.l.b16 %v532
    %v1528 = vunpack.c.l.b16 %v533
    %v1529 = vunpack.c.l.b16 %v534
    %v1530 = vunpack.c.l.b16 %v535
    %v1531 = vunpack.c.l.b16 %v536
    %v1532 = vunpack.c.l.b16 %v537
    %v1533 = vunpack.c.l.b16 %v538
    %v1534 = vunpack.c.l.b16 %v539
    %v1535 = vunpack.c.l.b16 %v540
    %v1536 = vunpack.c.l.b16 %v541
    %v1537 = vunpack.c.l.b16 %v542
    %v1538 = vunpack.c.l.b16 %v543
    %v1539 = vunpack.c.l.b16 %v544
    %v1540 = vunpack.c.l.b16 %v545
    %v1541 = vunpack.c.l.b16 %v546
    %v1542 = vunpack.c.l.b16 %v547
    %v1543 = vunpack.c.l.b16 %v548
    %v1544 = vunpack.c.l.b16 %v549
    %v1545 = vunpack.c.l.b16 %v550
    %v1546 = vunpack.c.l.b16 %v551
    %v1547 = vunpack.c.l.b16 %v552
    %v1548 = vunpack.c.l.b16 %v553
    %v1549 = vunpack.c.l.b16 %v554
    %v1550 = vunpack.c.l.b16 %v555
    %v1551 = vunpack.c.l.b16 %v556
    %v1552 = vunpack.c.l.b16 %v557
    %v1553 = vunpack.c.l.b16 %v558
    %v1554 = vunpack.c.l.b16 %v559
    %v1555 = vunpack.c.l.b16 %v560
    %v1556 = vunpack.c.l.b16 %v561
    %v1557 = vunpack.c.l.b16 %v562
    %v1558 = vunpack.c.l.b16 %v563
    %v1559 = vunpack.c.l.b16 %v564
    %v1560 = vunpack.c.l.b16 %v565
    %v1561 = vunpack.c.l.b16 %v566
    %v1562 = vunpack.c.l.b16 %v567
    %v1563 = vunpack.c.l.b16 %v568
    %v1564 = vunpack.c.l.b16 %v569
    %v1565 = vunpack.c.l.b16 %v570
    %v1566 = vunpack.c.l.b16 %v571
    %v1567 = vunpack.c.l.b16 %v572
    %v1568 = vunpack.c.l.b16 %v573
    %v1569 = vunpack.c.l.b16 %v574
    %v1570 = vunpack.c.l.b16 %v575
    %v1571 = vunpack.c.l.b16 %v576
    %v1572 = vunpack.c.l.b16 %v577
    %v1573 = vunpack.c.l.b16 %v578
    %v1574 = vunpack.c.l.b16 %v579
    %v1575 = vunpack.c.l.b16 %v580
    %v1576 = vunpack.c.l.b16 %v581
    %v1577 = vunpack.c.l.b16 %v582
    %v1578 = vunpack.c.l.b16 %v583
    %v1579 = vunpack.c.l.b16 %v584
    %v1580 = vunpack.c.l.b16 %v585
    %v1581 = vunpack.c.l.b16 %v586
    %v1582 = vunpack.c.l.b16 %v587
    %v1583 = vunpack.c.l.b16 %v588
    %v1584 = vunpack.c.l.b16 %v589
    %v1585 = vunpack.c.l.b16 %v590
    %v1586 = vunpack.c.l.b16 %v591
    %v1587 = vunpack.c.l.b16 %v592
    %v1588 = vunpack.c.l.b16 %v593
    %v1589 = vunpack.c.l.b16 %v594
    %v1590 = vunpack.c.l.b16 %v595
    %v1591 = vunpack.c.l.b16 %v596
    %v1592 = vunpack.c.l.b16 %v597
    %v1593 = vunpack.c.l.b16 %v598
    %v1594 = vunpack.c.l.b16 %v599
    %v1595 = vunpack.c.l.b16 %v600
    %v1596 = vunpack.c.l.b16 %v601
    %v1597 = vunpack.c.l.b16 %v602
    %v1598 = vunpack.c.l.b16 %v603
    %v1599 = vunpack.c.l.b16 %v604
    %v1600 = vunpack.c.l.b16 %v605
    %v1601 = vunpack.c.l.b16 %v606
    %v1602 = vunpack.c.l.b16 %v607
    %v1603 = vunpack.c.l.b16 %v608
    %v1604 = vunpack.c.l.b16 %v609
    %v1605 = vunpack.c.l.b16 %v610
    %v1606 = vunpack.c.l.b16 %v611
    %v1607 = vunpack.c.l.b16 %v612
    %v1608 = vunpack.c.l.b16 %v613
    %v1609 = vunpack.c.l.b16 %v614
    %v1610 = vunpack.c.l.b16 %v615
    %v1611 = vunpack.c.l.b16 %v616
    %v1612 = vunpack.c.l.b16 %v617
    %v1613 = vunpack.c.l.b16 %v618
    %v1614 = vunpack.c.l.b16 %v619
    %v1615 = vunpack.c.l.b16 %v620
    %v1616 = vunpack.c.l.b16 %v621
    %v1617 = vunpack.c.l.b16 %v622
    %v1618 = vunpack.c.l.b16 %v623
    %v1619 = vunpack.c.l.b16 %v624
    %v1620 = vunpack.c.l.b16 %v625
    %v1621 = vunpack.c.l.b16 %v626
    %v1622 = vunpack.c.l.b16 %v627
    %v1623 = vunpack.c.l.b16 %v628
    %v1624 = vunpack.c.l.b16 %v629
    %v1625 = vunpack.c.l.b16 %v630
    %v1626 = vunpack.c.l.b16 %v631
    %v1627 = vunpack.c.l.b16 %v632
    %v1628 = vunpack.c.l.b16 %v633
    %v1629 = vunpack.c.l.b16 %v634
    %v1630 = vunpack.c.l.b16 %v635
    %v1631 = vunpack.c.l.b16 %v636
    %v1632 = vunpack.c.l.b16 %v637
    %v1633 = vunpack.c.l.b16 %v638
    %v1634 = vunpack.c.l.b16 %v639
    %v1635 = vunpack.c.l.b16 %v640
    %v1636 = vunpack.c.l.b16 %v641
    %v1637 = vunpack.c.l.b16 %v642
    %v1638 = vunpack.c.l.b16 %v643
    %v1639 = vunpack.c.l.b16 %v644
    %v1640 = vunpack.c.l.b16 %v645
    %v1641 = vunpack.c.l.b16 %v646
    %v1642 = vunpack.c.l.b16 %v647
    %v1643 = vunpack.c.l.b16 %v648
    %v1644 = vunpack.c.l.b16 %v649
    %v1645 = vunpack.c.l.b16 %v650
    %v1646 = vunpack.c.l.b16 %v651
    %v1647 = vunpack.c.l.b16 %v652
    %v1648 = vunpack.c.l.b16 %v653
    %v1649 = vunpack.c.l.b16 %v654
    %v1650 = vunpack.c.l.b16 %v655
    %v1651 = vunpack.c.l.b16 %v656
    %v1652 = vunpack.c.l.b16 %v657
    %v1653 = vunpack.c.l.b16 %v658
    %v1654 = vunpack.c.l.b16 %v659
    %v1655 = vunpack.c.l.b16 %v660
    %v1656 = vunpack.c.l.b16 %v661
    %v1657 = vunpack.c.l.b16 %v662
    %v1658 = vunpack.c.l.b16 %v663
    %v1659 = vunpack.c.l.b16 %v664
    %v1660 = vunpack.c.l.b16 %v665
    %v1661 = vunpack.c.l.b16 %v666
    %v1662 = vunpack.c.l.b16 %v667
    %v1663 = vunpack.c.l.b16 %v668
    %v1664 = vunpack.c.l.b16 %v669
    %v1665 = vunpack.c.l.b16 %v670
    %v1666 = vunpack.c.l.b16 %v671
    %v1667 = vunpack.c.l.b16 %v672
    %v1668 = vunpack.c.l.b16 %v673
    %v1669 = vunpack.c.l.b16 %v674
    %v1670 = vunpack.c.l.b16 %v675
    %v1671 = vunpack.c.l.b16 %v676
    %v1672 = vunpack.c.l.b16 %v677
    %v1673 = vunpack.c.l.b16 %v678
    %v1674 = vunpack.c.l.b16 %v679
    %v1675 = vunpack.c.l.b16 %v680
    %v1676 = vunpack.c.l.b16 %v681
    %v1677 = vunpack.c.l.b16 %v682
    %v1678 = vunpack.c.l.b16 %v683
    %v1679 = vunpack.c.l.b16 %v684
    %v1680 = vunpack.c.l.b16 %v685
    %v1681 = vunpack.c.l.b16 %v686
    %v1682 = vunpack.c.l.b16 %v687
    %v1683 = vunpack.c.l.b16 %v688
    %v1684 = vunpack.c.l.b16 %v689
    %v1685 = vunpack.c.l.b16 %v690
    %v1686 = vunpack.c.l.b16 %v691
    %v1687 = vunpack.c.l.b16 %v692
    %v1688 = vunpack.c.l.b16 %v693
    %v1689 = vunpack.c.l.b16 %v694
    %v1690 = vunpack.c.l.b16 %v695
    %v1691 = vunpack.c.l.b16 %v696
    %v1692 = vunpack.c.l.b16 %v697
    %v1693 = vunpack.c.l.b16 %v698
    %v1694 = vunpack.c.l.b16 %v699
    %v1695 = vunpack.c.l.b16 %v700
    %v1696 = vunpack.c.l.b16 %v701
    %v1697 = vunpack.c.l.b16 %v702
    %v1698 = vunpack.c.l.b16 %v703
    %v1699 = vunpack.c.l.b16 %v704
    %v1700 = vunpack.c.l.b16 %v705
    %v1701 = vunpack.c.l.b16 %v706
    %v1702 = vunpack.c.l.b16 %v707
    %v1703 = vunpack.c.l.b16 %v708
    %v1704 = vunpack.c.l.b16 %v709
    %v1705 = vunpack.c.l.b16 %v710
    %v1706 = vunpack.c.l.b16 %v711
    %v1707 = vunpack.c.l.b16 %v712
    %v1708 = vunpack.c.l.b16 %v713
    %v1709 = vunpack.c.l.b16 %v714
    %v1710 = vunpack.c.l.b16 %v715
    %v1711 = vunpack.c.l.b16 %v716
    %v1712 = vunpack.c.l.b16 %v717
    %v1713 = vunpack.c.l.b16 %v718
    %v1714 = vunpack.c.l.b16 %v719
    %v1715 = vunpack.c.l.b16 %v720
    %v1716 = vunpack.c.l.b16 %v721
    %v1717 = vunpack.c.l.b16 %v722
    %v1718 = vunpack.c.l.b16 %v723
    %v1719 = vunpack.c.l.b16 %v724
    %v1720 = vunpack.c.l.b16 %v725
    %v1721 = vunpack.c.l.b16 %v726
    %v1722 = vunpack.c.l.b16 %v727
    %v1723 = vunpack.c.l.b16 %v728
    %v1724 = vunpack.c.l.b16 %v729
    %v1725 = vunpack.c.l.b16 %v730
    %v1726 = vunpack.c.l.b16 %v731
    %v1727 = vunpack.c.l.b16 %v732
    %v1728 = vunpack.c.l.b16 %v733
    %v1729 = vunpack.c.l.b16 %v734
    %v1730 = vunpack.c.l.b16 %v735
    %v1731 = vunpack.c.l.b16 %v736
    %v1732 = vunpack.c.l.b16 %v737
    %v1733 = vunpack.c.l.b16 %v738
    %v1734 = vunpack.c.l.b16 %v739
    %v1735 = vunpack.c.l.b16 %v740
    %v1736 = vunpack.c.l.b16 %v741
    %v1737 = vunpack.c.l.b16 %v742
    %v1738 = vunpack.c.l.b16 %v743
    %v1739 = vunpack.c.l.b16 %v744
    %v1740 = vunpack.c.l.b16 %v745
    %v1741 = vunpack.c.l.b16 %v746
    %v1742 = vunpack.c.l.b16 %v747
    %v1743 = vunpack.c.l.b16 %v748
    %v1744 = vunpack.c.l.b16 %v749
    %v1745 = vunpack.c.l.b16 %v750
    %v1746 = vunpack.c.l.b16 %v751
    %v1747 = vunpack.c.l.b16 %v752
    %v1748 = vunpack.c.l.b16 %v753
    %v1749 = vunpack.c.l.b16 %v754
    %v1750 = vunpack.c.l.b16 %v755
    %v1751 = vunpack.c.l.b16 %v756
    %v1752 = vunpack.c.l.b16 %v757
    %v1753 = vunpack.c.l.b16 %v758
    %v1754 = vunpack.c.l.b16 %v759
    %v1755 = vunpack.c.l.b16 %v760
    %v1756 = vunpack.c.l.b16 %v761
    %v1757 = vunpack.c.l.b16 %v762
    %v1758 = vunpack.c.l.b16 %v763
    %v1759 = vunpack.c.l.b16 %v764
    %v1760 = vunpack.c.l.b16 %v765
    %v1761 = vunpack.c.l.b16 %v766
    %v1762 = vunpack.c.l.b16 %v767
    %v1763 = vunpack.c.l.b16 %v768
    %v1764 = vpack.c.b16 %v1269, %v1268
    %v1765 = vpack.c.b16 %v1271, %v1270
    %v1766 = vpack.c.b16 %v1273, %v1272
    %v1767 = vpack.c.b16 %v1275, %v1274
    %v1768 = vpack.c.b16 %v1277, %v1276
    %v1769 = vpack.c.b16 %v1279, %v1278
    %v1770 = vpack.c.b16 %v1281, %v1280
    %v1771 = vpack.c.b16 %v1283, %v1282
    %v1772 = vpack.c.b16 %v1285, %v1284
    %v1773 = vpack.c.b16 %v1287, %v1286
    %v1774 = vpack.c.b16 %v1289, %v1288
    %v1775 = vpack.c.b16 %v1291, %v1290
    %v1776 = vpack.c.b16 %v1293, %v1292
    %v1777 = vpack.c.b16 %v1295, %v1294
    %v1778 = vpack.c.b16 %v1297, %v1296
    %v1779 = vpack.c.b16 %v1299, %v1298
    %v1780 = vpack.c.b16 %v1301, %v1300
    %v1781 = vpack.c.b16 %v1303, %v1302
    %v1782 = vpack.c.b16 %v1305, %v1304
    %v1783 = vpack.c.b16 %v1307, %v1306
    %v1784 = vpack.c.b16 %v1309, %v1308
    %v1785 = vpack.c.b16 %v1311, %v1310
    %v1786 = vpack.c.b16 %v1313, %v1312
    %v1787 = vpack.c.b16 %v1315, %v1314
    %v1788 = vpack.c.b16 %v1317, %v1316
    %v1789 = vpack.c.b16 %v1319, %v1318
    %v1790 = vpack.c.b16 %v1321, %v1320
    %v1791 = vpack.c.b16 %v1323, %v1322
    %v1792 = vpack.c.b16 %v1325, %v1324
    %v1793 = vpack.c.b16 %v1327, %v1326
    %v1794 = vpack.c.b16 %v1329, %v1328
    %v1795 = vpack.c.b16 %v1331, %v1330
    %v1796 = vpack.c.b16 %v1333, %v1332
    %v1797 = vpack.c.b16 %v1335, %v1334
    %v1798 = vpack.c.b16 %v1337, %v1336
    %v1799 = vpack.c.b16 %v1339, %v1338
    %v1800 = vpack.c.b16 %v1341, %v1340
    %v1801 = vpack.c.b16 %v1343, %v1342
    %v1802 = vpack.c.b16 %v1345, %v1344
    %v1803 = vpack.c.b16 %v1347, %v1346
    %v1804 = vpack.c.b16 %v1349, %v1348
    %v1805 = vpack.c.b16 %v1351, %v1350
    %v1806 = vpack.c.b16 %v1353, %v1352
    %v1807 = vpack.c.b16 %v1355, %v1354
    %v1808 = vpack.c.b16 %v1357, %v1356
    %v1809 = vpack.c.b16 %v1359, %v1358
    %v1810 = vpack.c.b16 %v1361, %v1360
    %v1811 = vpack.c.b16 %v1363, %v1362
    %v1812 = vpack.c.b16 %v1365, %v1364
    %v1813 = vpack.c.b16 %v1367, %v1366
    %v1814 = vpack.c.b16 %v1369, %v1368
    %v1815 = vpack.c.b16 %v1371, %v1370
    %v1816 = vpack.c.b16 %v1373, %v1372
    %v1817 = vpack.c.b16 %v1375, %v1374
    %v1818 = vpack.c.b16 %v1377, %v1376
    %v1819 = vpack.c.b16 %v1379, %v1378
    %v1820 = vpack.c.b16 %v1381, %v1380
    %v1821 = vpack.c.b16 %v1383, %v1382
    %v1822 = vpack.c.b16 %v1385, %v1384
    %v1823 = vpack.c.b16 %v1387, %v1386
    %v1824 = vpack.c.b16 %v1389, %v1388
    %v1825 = vpack.c.b16 %v1391, %v1390
    %v1826 = vpack.c.b16 %v1393, %v1392
    %v1827 = vpack.c.b16 %v1395, %v1394
    %v1828 = vpack.c.b16 %v1397, %v1396
    %v1829 = vpack.c.b16 %v1399, %v1398
    %v1830 = vpack.c.b16 %v1401, %v1400
    %v1831 = vpack.c.b16 %v1403, %v1402
    %v1832 = vpack.c.b16 %v1405, %v1404
    %v1833 = vpack.c.b16 %v1407, %v1406
    %v1834 = vpack.c.b16 %v1409, %v1408
    %v1835 = vpack.c.b16 %v1411, %v1410
    %v1836 = vpack.c.b16 %v1413, %v1412
    %v1837 = vpack.c.b16 %v1415, %v1414
    %v1838 = vpack.c.b16 %v1417, %v1416
    %v1839 = vpack.c.b16 %v1419, %v1418
    %v1840 = vpack.c.b16 %v1421, %v1420
    %v1841 = vpack.c.b16 %v1423, %v1422
    %v1842 = vpack.c.b16 %v1425, %v1424
    %v1843 = vpack.c.b16 %v1427, %v1426
    %v1844 = vpack.c.b16 %v1429, %v1428
    %v1845 = vpack.c.b16 %v1431, %v1430
    %v1846 = vpack.c.b16 %v1433, %v1432
    %v1847 = vpack.c.b16 %v1435, %v1434
    %v1848 = vpack.c.b16 %v1437, %v1436
    %v1849 = vpack.c.b16 %v1439, %v1438
    %v1850 = vpack.c.b16 %v1441, %v1440
    %v1851 = vpack.c.b16 %v1443, %v1442
    %v1852 = vpack.c.b16 %v1445, %v1444
    %v1853 = vpack.c.b16 %v1447, %v1446
    %v1854 = vpack.c.b16 %v1449, %v1448
    %v1855 = vpack.c.b16 %v1451, %v1450
    %v1856 = vpack.c.b16 %v1453, %v1452
    %v1857 = vpack.c.b16 %v1455, %v1454
    %v1858 = vpack.c.b16 %v1457, %v1456
    %v1859 = vpack.c.b16 %v1459, %v1458
    %v1860 = vpack.c.b16 %v1461, %v1460
    %v1861 = vpack.c.b16 %v1463, %v1462
    %v1862 = vpack.c.b16 %v1465, %v1464
    %v1863 = vpack.c.b16 %v1467, %v1466
    %v1864 = vpack.c.b16 %v1469, %v1468
    %v1865 = vpack.c.b16 %v1471, %v1470
    %v1866 = vpack.c.b16 %v1473, %v1472
    %v1867 = vpack.c.b16 %v1475, %v1474
    %v1868 = vpack.c.b16 %v1477, %v1476
    %v1869 = vpack.c.b16 %v1479, %v1478
    %v1870 = vpack.c.b16 %v1481, %v1480
    %v1871 = vpack.c.b16 %v1483, %v1482
    %v1872 = vpack.c.b16 %v1485, %v1484
    %v1873 = vpack.c.b16 %v1487, %v1486
    %v1874 = vpack.c.b16 %v1489, %v1488
    %v1875 = vpack.c.b16 %v1491, %v1490
    %v1876 = vpack.c.b16 %v1493, %v1492
    %v1877 = vpack.c.b16 %v1495, %v1494
    %v1878 = vpack.c.b16 %v1497, %v1496
    %v1879 = vpack.c.b16 %v1499, %v1498
    %v1880 = vpack.c.b16 %v1501, %v1500
    %v1881 = vpack.c.b16 %v1503, %v1502
    %v1882 = vpack.c.b16 %v1505, %v1504
    %v1883 = vpack.c.b16 %v1507, %v1506
    %v1884 = vpack.c.b16 %v1509, %v1508
    %v1885 = vpack.c.b16 %v1511, %v1510
    %v1886 = vpack.c.b16 %v1513, %v1512
    %v1887 = vpack.c.b16 %v1515, %v1514
    %v1888 = vpack.c.b16 %v1517, %v1516
    %v1889 = vpack.c.b16 %v1519, %v1518
    %v1890 = vpack.c.b16 %v1521, %v1520
    %v1891 = vpack.c.b16 %v1523, %v1522
    %v1892 = vpack.c.b16 %v1525, %v1524
    %v1893 = vpack.c.b16 %v1527, %v1526
    %v1894 = vpack.c.b16 %v1529, %v1528
    %v1895 = vpack.c.b16 %v1531, %v1530
    %v1896 = vpack.c.b16 %v1533, %v1532
    %v1897 = vpack.c.b16 %v1535, %v1534
    %v1898 = vpack.c.b16 %v1537, %v1536
    %v1899 = vpack.c.b16 %v1539, %v1538
    %v1900 = vpack.c.b16 %v1541, %v1540
    %v1901 = vpack.c.b16 %v1543, %v1542
    %v1902 = vpack.c.b16 %v1545, %v1544
    %v1903 = vpack.c.b16 %v1547, %v1546
    %v1904 = vpack.c.b16 %v1549, %v1548
    %v1905 = vpack.c.b16 %v1551, %v1550
    %v1906 = vpack.c.b16 %v1553, %v1552
    %v1907 = vpack.c.b16 %v1555, %v1554
    %v1908 = vpack.c.b16 %v1557, %v1556
    %v1909 = vpack.c.b16 %v1559, %v1558
    %v1910 = vpack.c.b16 %v1561, %v1560
    %v1911 = vpack.c.b16 %v1563, %v1562
    %v1912 = vpack.c.b16 %v1565, %v1564
    %v1913 = vpack.c.b16 %v1567, %v1566
    %v1914 = vpack.c.b16 %v1569, %v1568
    %v1915 = vpack.c.b16 %v1571, %v1570
    %v1916 = vpack.c.b16 %v1573, %v1572
    %v1917 = vpack.c.b16 %v1575, %v1574
    %v1918 = vpack.c.b16 %v1577, %v1576
    %v1919 = vpack.c.b16 %v1579, %v1578
    %v1920 = vpack.c.b16 %v1581, %v1580
    %v1921 = vpack.c.b16 %v1583, %v1582
    %v1922 = vpack.c.b16 %v1585, %v1584
    %v1923 = vpack.c.b16 %v1587, %v1586
    %v1924 = vpack.c.b16 %v1589, %v1588
    %v1925 = vpack.c.b16 %v1591, %v1590
    %v1926 = vpack.c.b16 %v1593, %v1592
    %v1927 = vpack.c.b16 %v1595, %v1594
    %v1928 = vpack.c.b16 %v1597, %v1596
    %v1929 = vpack.c.b16 %v1599, %v1598
    %v1930 = vpack.c.b16 %v1601, %v1600
    %v1931 = vpack.c.b16 %v1603, %v1602
    %v1932 = vpack.c.b16 %v1605, %v1604
    %v1933 = vpack.c.b16 %v1607, %v1606
    %v1934 = vpack.c.b16 %v1609, %v1608
    %v1935 = vpack.c.b16 %v1611, %v1610
    %v1936 = vpack.c.b16 %v1613, %v1612
    %v1937 = vpack.c.b16 %v1615, %v1614
    %v1938 = vpack.c.b16 %v1617, %v1616
    %v1939 = vpack.c.b16 %v1619, %v1618
    %v1940 = vpack.c.b16 %v1621, %v1620
    %v1941 = vpack.c.b16 %v1623, %v1622
    %v1942 = vpack.c.b16 %v1625, %v1624
    %v1943 = vpack.c.b16 %v1627, %v1626
    %v1944 = vpack.c.b16 %v1629, %v1628
    %v1945 = vpack.c.b16 %v1631, %v1630
    %v1946 = vpack.c.b16 %v1633, %v1632
    %v1947 = vpack.c.b16 %v1635, %v1634
    %v1948 = vpack.c.b16 %v1637, %v1636
    %v1949 = vpack.c.b16 %v1639, %v1638
    %v1950 = vpack.c.b16 %v1641, %v1640
    %v1951 = vpack.c.b16 %v1643, %v1642
    %v1952 = vpack.c.b16 %v1645, %v1644
    %v1953 = vpack.c.b16 %v1647, %v1646
    %v1954 = vpack.c.b16 %v1649, %v1648
    %v1955 = vpack.c.b16 %v1651, %v1650
    %v1956 = vpack.c.b16 %v1653, %v1652
    %v1957 = vpack.c.b16 %v1655, %v1654
    %v1958 = vpack.c.b16 %v1657, %v1656
    %v1959 = vpack.c.b16 %v1659, %v1658
    %v1960 = vpack.c.b16 %v1661, %v1660
    %v1961 = vpack.c.b16 %v1663, %v1662
    %v1962 = vpack.c.b16 %v1665, %v1664
    %v1963 = vpack.c.b16 %v1667, %v1666
    %v1964 = vpack.c.b16 %v1669, %v1668
    %v1965 = vpack.c.b16 %v1671, %v1670
    %v1966 = vpack.c.b16 %v1673, %v1672
    %v1967 = vpack.c.b16 %v1675, %v1674
    %v1968 = vpack.c.b16 %v1677, %v1676
    %v1969 = vpack.c.b16 %v1679, %v1678
    %v1970 = vpack.c.b16 %v1681, %v1680
    %v1971 = vpack.c.b16 %v1683, %v1682
    %v1972 = vpack.c.b16 %v1685, %v1684
    %v1973 = vpack.c.b16 %v1687, %v1686
    %v1974 = vpack.c.b16 %v1689, %v1688
    %v1975 = vpack.c.b16 %v1691, %v1690
    %v1976 = vpack.c.b16 %v1693, %v1692
    %v1977 = vpack.c.b16 %v1695, %v1694
    %v1978 = vpack.c.b16 %v1697, %v1696
    %v1979 = vpack.c.b16 %v1699, %v1698
    %v1980 = vpack.c.b16 %v1701, %v1700
    %v1981 = vpack.c.b16 %v1703, %v1702
    %v1982 = vpack.c.b16 %v1705, %v1704
    %v1983 = vpack.c.b16 %v1707, %v1706
    %v1984 = vpack.c.b16 %v1709, %v1708
    %v1985 = vpack.c.b16 %v1711, %v1710
    %v1986 = vpack.c.b16 %v1713, %v1712
    %v1987 = vpack.c.b16 %v1715, %v1714
    %v1988 = vpack.c.b16 %v1717, %v1716
    %v1989 = vpack.c.b16 %v1719, %v1718
    %v1990 = vpack.c.b16 %v1721, %v1720
    %v1991 = vpack.c.b16 %v1723, %v1722
    %v1992 = vpack.c.b16 %v1725, %v1724
    %v1993 = vpack.c.b16 %v1727, %v1726
    %v1994 = vpack.c.b16 %v1729, %v1728
    %v1995 = vpack.c.b16 %v1731, %v1730
    %v1996 = vpack.c.b16 %v1733, %v1732
    %v1997 = vpack.c.b16 %v1735, %v1734
    %v1998 = vpack.c.b16 %v1737, %v1736
    %v1999 = vpack.c.b16 %v1739, %v1738
    %v2000 = vpack.c.b16 %v1741, %v1740
    %v2001 = vpack.c.b16 %v1743, %v1742
    %v2002 = vpack.c.b16 %v1745, %v1744
    %v2003 = vpack.c.b16 %v1747, %v1746
    %v2004 = vpack.c.b16 %v1749, %v1748
    %v2005 = vpack.c.b16 %v1751, %v1750
    %v2006 = vpack.c.b16 %v1753, %v1752
    %v2007 = vpack.c.b16 %v1755, %v1754
    %v2008 = vpack.c.b16 %v1757, %v1756
    %v2009 = vpack.c.b16 %v1759, %v1758
    %v2010 = vpack.c.b16 %v1761, %v1760
    %v2011 = vpack.c.b16 %v1763, %v1762
    %2260 = vmatprep.subr.bf16.mxu0 0
    %2261 = vmatpush1.bf16.msra.mxu0 %v1764
    %2262 = vmatprep.subr.bf16.mxu0 0
    %2263 = vmatpush1.bf16.msra.mxu0 %v1765
    %2264 = vmatprep.subr.bf16.mxu0 0
    %2265 = vmatpush1.bf16.msra.mxu0 %v1766
    %2266 = vmatprep.subr.bf16.mxu0 0
    %2267 = vmatpush1.bf16.msra.mxu0 %v1767
    %2268 = vmatprep.subr.bf16.mxu0 0
    %2269 = vmatpush1.bf16.msra.mxu0 %v1768
    %2270 = vmatprep.subr.bf16.mxu0 0
    %2271 = vmatpush1.bf16.msra.mxu0 %v1769
    %2272 = vmatprep.subr.bf16.mxu0 0
    %2273 = vmatpush1.bf16.msra.mxu0 %v1770
    %2274 = vmatprep.subr.bf16.mxu0 0
    %2275 = vmatpush1.bf16.msra.mxu0 %v1771
    %2276 = vmatprep.subr.bf16.mxu0 0
    %2277 = vmatpush1.bf16.msra.mxu0 %v1772
    %2278 = vmatprep.subr.bf16.mxu0 0
    %2279 = vmatpush1.bf16.msra.mxu0 %v1773
    %2280 = vmatprep.subr.bf16.mxu0 0
    %2281 = vmatpush1.bf16.msra.mxu0 %v1774
    %2282 = vmatprep.subr.bf16.mxu0 0
    %2283 = vmatpush1.bf16.msra.mxu0 %v1775
    %2284 = vmatprep.subr.bf16.mxu0 0
    %2285 = vmatpush1.bf16.msra.mxu0 %v1776
    %2286 = vmatprep.subr.bf16.mxu0 0
    %2287 = vmatpush1.bf16.msra.mxu0 %v1777
    %2288 = vmatprep.subr.bf16.mxu0 0
    %2289 = vmatpush1.bf16.msra.mxu0 %v1778
    %2290 = vmatprep.subr.bf16.mxu0 0
    %2291 = vmatpush1.bf16.msra.mxu0 %v1779
    %2292 = vmatprep.mubr.bf16.mxu0 %v243
    %2293 = vmatmul.mubr.bf16.gmra.mrb[0].mxu0 %v242
    %v2294 = vpop.f32.mrb[0].mxu0
    %v2295 = vadd.f32 %v771, %v2294
    %v2296 = vpop.f32.mrb[0].mxu0
    %v2297 = vpop.f32.mrb[0].mxu0
    %v2298 = vpop.f32.mrb[0].mxu0
    %2299 = vdwg.mxu0
    %2300 = vmatprep.subr.bf16.mxu0 0
    %2301 = vmatpush1.bf16.msra.mxu0 %v1780
    %2302 = vmatprep.subr.bf16.mxu0 0
    %2303 = vmatpush1.bf16.msra.mxu0 %v1781
    %2304 = vmatprep.subr.bf16.mxu0 0
    %2305 = vmatpush1.bf16.msra.mxu0 %v1782
    %2306 = vmatprep.subr.bf16.mxu0 0
    %2307 = vmatpush1.bf16.msra.mxu0 %v1783
    %2308 = vmatprep.subr.bf16.mxu0 0
    %2309 = vmatpush1.bf16.msra.mxu0 %v1784
    %2310 = vmatprep.subr.bf16.mxu0 0
    %2311 = vmatpush1.bf16.msra.mxu0 %v1785
    %2312 = vmatprep.subr.bf16.mxu0 0
    %2313 = vmatpush1.bf16.msra.mxu0 %v1786
    %2314 = vmatprep.subr.bf16.mxu0 0
    %2315 = vmatpush1.bf16.msra.mxu0 %v1787
    %2316 = vmatprep.subr.bf16.mxu0 0
    %2317 = vmatpush1.bf16.msra.mxu0 %v1788
    %2318 = vmatprep.subr.bf16.mxu0 0
    %2319 = vmatpush1.bf16.msra.mxu0 %v1789
    %2320 = vmatprep.subr.bf16.mxu0 0
    %2321 = vmatpush1.bf16.msra.mxu0 %v1790
    %2322 = vmatprep.subr.bf16.mxu0 0
    %2323 = vmatpush1.bf16.msra.mxu0 %v1791
    %2324 = vmatprep.subr.bf16.mxu0 0
    %2325 = vmatpush1.bf16.msra.mxu0 %v1792
    %2326 = vmatprep.subr.bf16.mxu0 0
    %2327 = vmatpush1.bf16.msra.mxu0 %v1793
    %2328 = vmatprep.subr.bf16.mxu0 0
    %2329 = vmatpush1.bf16.msra.mxu0 %v1794
    %2330 = vmatprep.subr.bf16.mxu0 0
    %2331 = vmatpush1.bf16.msra.mxu0 %v1795
    %2332 = vmatprep.mubr.bf16.mxu0 %v245
    %2333 = vmatmul.mubr.bf16.gmra.mrb[0].mxu0 %v244
    %v2334 = vpop.f32.mrb[0].mxu0
    %v2335 = vadd.f32 %v2295, %v2334
    %v2336 = vpop.f32.mrb[0].mxu0
    %v2337 = vpop.f32.mrb[0].mxu0
    %v2338 = vpop.f32.mrb[0].mxu0
    %2339 = vdwg.mxu0
    %2340 = vmatprep.subr.bf16.mxu0 0
    %2341 = vmatpush1.bf16.msra.mxu0 %v1796
    %2342 = vmatprep.subr.bf16.mxu0 0
    %2343 = vmatpush1.bf16.msra.mxu0 %v1797
    %2344 = vmatprep.subr.bf16.mxu0 0
    %2345 = vmatpush1.bf16.msra.mxu0 %v1798
    %2346 = vmatprep.subr.bf16.mxu0 0
    %2347 = vmatpush1.bf16.msra.mxu0 %v1799
    %2348 = vmatprep.subr.bf16.mxu0 0
    %2349 = vmatpush1.bf16.msra.mxu0 %v1800
    %2350 = vmatprep.subr.bf16.mxu0 0
    %2351 = vmatpush1.bf16.msra.mxu0 %v1801
    %2352 = vmatprep.subr.bf16.mxu0 0
    %2353 = vmatpush1.bf16.msra.mxu0 %v1802
    %2354 = vmatprep.subr.bf16.mxu0 0
    %2355 = vmatpush1.bf16.msra.mxu0 %v1803
    %2356 = vmatprep.subr.bf16.mxu0 0
    %2357 = vmatpush1.bf16.msra.mxu0 %v1804
    %2358 = vmatprep.subr.bf16.mxu0 0
    %2359 = vmatpush1.bf16.msra.mxu0 %v1805
    %2360 = vmatprep.subr.bf16.mxu0 0
    %2361 = vmatpush1.bf16.msra.mxu0 %v1806
    %2362 = vmatprep.subr.bf16.mxu0 0
    %2363 = vmatpush1.bf16.msra.mxu0 %v1807
    %2364 = vmatprep.subr.bf16.mxu0 0
    %2365 = vmatpush1.bf16.msra.mxu0 %v1808
    %2366 = vmatprep.subr.bf16.mxu0 0
    %2367 = vmatpush1.bf16.msra.mxu0 %v1809
    %2368 = vmatprep.subr.bf16.mxu0 0
    %2369 = vmatpush1.bf16.msra.mxu0 %v1810
    %2370 = vmatprep.subr.bf16.mxu0 0
    %2371 = vmatpush1.bf16.msra.mxu0 %v1811
    %2372 = vmatprep.mubr.bf16.mxu0 %v247
    %2373 = vmatmul.mubr.bf16.gmra.mrb[0].mxu0 %v246
    %v2374 = vpop.f32.mrb[0].mxu0
    %v2375 = vadd.f32 %v2335, %v2374
    %v2376 = vpop.f32.mrb[0].mxu0
    %v2377 = vpop.f32.mrb[0].mxu0
    %v2378 = vpop.f32.mrb[0].mxu0
    %2379 = vdwg.mxu0
    %2380 = vmatprep.subr.bf16.mxu0 0
    %2381 = vmatpush1.bf16.msra.mxu0 %v1812
    %2382 = vmatprep.subr.bf16.mxu0 0
    %2383 = vmatpush1.bf16.msra.mxu0 %v1813
    %2384 = vmatprep.subr.bf16.mxu0 0
    %2385 = vmatpush1.bf16.msra.mxu0 %v1814
    %2386 = vmatprep.subr.bf16.mxu0 0
    %2387 = vmatpush1.bf16.msra.mxu0 %v1815
    %2388 = vmatprep.subr.bf16.mxu0 0
    %2389 = vmatpush1.bf16.msra.mxu0 %v1816
    %2390 = vmatprep.subr.bf16.mxu0 0
    %2391 = vmatpush1.bf16.msra.mxu0 %v1817
    %2392 = vmatprep.subr.bf16.mxu0 0
    %2393 = vmatpush1.bf16.msra.mxu0 %v1818
    %2394 = vmatprep.subr.bf16.mxu0 0
    %2395 = vmatpush1.bf16.msra.mxu0 %v1819
    %2396 = vmatprep.subr.bf16.mxu0 0
    %2397 = vmatpush1.bf16.msra.mxu0 %v1820
    %2398 = vmatprep.subr.bf16.mxu0 0
    %2399 = vmatpush1.bf16.msra.mxu0 %v1821
    %2400 = vmatprep.subr.bf16.mxu0 0
    %2401 = vmatpush1.bf16.msra.mxu0 %v1822
    %2402 = vmatprep.subr.bf16.mxu0 0
    %2403 = vmatpush1.bf16.msra.mxu0 %v1823
    %2404 = vmatprep.subr.bf16.mxu0 0
    %2405 = vmatpush1.bf16.msra.mxu0 %v1824
    %2406 = vmatprep.subr.bf16.mxu0 0
    %2407 = vmatpush1.bf16.msra.mxu0 %v1825
    %2408 = vmatprep.subr.bf16.mxu0 0
    %2409 = vmatpush1.bf16.msra.mxu0 %v1826
    %2410 = vmatprep.subr.bf16.mxu0 0
    %2411 = vmatpush1.bf16.msra.mxu0 %v1827
    %2412 = vmatprep.mubr.bf16.mxu0 %v249
    %2413 = vmatmul.mubr.bf16.gmra.mrb[0].mxu0 %v248
    %v2414 = vpop.f32.mrb[0].mxu0
    %v2415 = vadd.f32 %v2375, %v2414
    %v2416 = vpop.f32.mrb[0].mxu0
    %v2417 = vpop.f32.mrb[0].mxu0
    %v2418 = vpop.f32.mrb[0].mxu0
    %2419 = vdwg.mxu0
    %2420 = vmatprep.subr.bf16.mxu0 0
    %2421 = vmatpush1.bf16.msra.mxu0 %v1828
    %2422 = vmatprep.subr.bf16.mxu0 0
    %2423 = vmatpush1.bf16.msra.mxu0 %v1829
    %2424 = vmatprep.subr.bf16.mxu0 0
    %2425 = vmatpush1.bf16.msra.mxu0 %v1830
    %2426 = vmatprep.subr.bf16.mxu0 0
    %2427 = vmatpush1.bf16.msra.mxu0 %v1831
    %2428 = vmatprep.subr.bf16.mxu0 0
    %2429 = vmatpush1.bf16.msra.mxu0 %v1832
    %2430 = vmatprep.subr.bf16.mxu0 0
    %2431 = vmatpush1.bf16.msra.mxu0 %v1833
    %2432 = vmatprep.subr.bf16.mxu0 0
    %2433 = vmatpush1.bf16.msra.mxu0 %v1834
    %2434 = vmatprep.subr.bf16.mxu0 0
    %2435 = vmatpush1.bf16.msra.mxu0 %v1835
    %2436 = vmatprep.subr.bf16.mxu0 0
    %2437 = vmatpush1.bf16.msra.mxu0 %v1836
    %2438 = vmatprep.subr.bf16.mxu0 0
    %2439 = vmatpush1.bf16.msra.mxu0 %v1837
    %2440 = vmatprep.subr.bf16.mxu0 0
    %2441 = vmatpush1.bf16.msra.mxu0 %v1838
    %2442 = vmatprep.subr.bf16.mxu0 0
    %2443 = vmatpush1.bf16.msra.mxu0 %v1839
    %2444 = vmatprep.subr.bf16.mxu0 0
    %2445 = vmatpush1.bf16.msra.mxu0 %v1840
    %2446 = vmatprep.subr.bf16.mxu0 0
    %2447 = vmatpush1.bf16.msra.mxu0 %v1841
    %2448 = vmatprep.subr.bf16.mxu0 0
    %2449 = vmatpush1.bf16.msra.mxu0 %v1842
    %2450 = vmatprep.subr.bf16.mxu0 0
    %2451 = vmatpush1.bf16.msra.mxu0 %v1843
    %2452 = vmatprep.mubr.bf16.mxu0 %v251
    %2453 = vmatmul.mubr.bf16.gmra.mrb[0].mxu0 %v250
    %v2454 = vpop.f32.mrb[0].mxu0
    %v2455 = vadd.f32 %v2415, %v2454
    %v2456 = vpop.f32.mrb[0].mxu0
    %v2457 = vpop.f32.mrb[0].mxu0
    %v2458 = vpop.f32.mrb[0].mxu0
    %2459 = vdwg.mxu0
    %2460 = vmatprep.subr.bf16.mxu0 0
    %2461 = vmatpush1.bf16.msra.mxu0 %v1844
    %2462 = vmatprep.subr.bf16.mxu0 0
    %2463 = vmatpush1.bf16.msra.mxu0 %v1845
    %2464 = vmatprep.subr.bf16.mxu0 0
    %2465 = vmatpush1.bf16.msra.mxu0 %v1846
    %2466 = vmatprep.subr.bf16.mxu0 0
    %2467 = vmatpush1.bf16.msra.mxu0 %v1847
    %2468 = vmatprep.subr.bf16.mxu0 0
    %2469 = vmatpush1.bf16.msra.mxu0 %v1848
    %2470 = vmatprep.subr.bf16.mxu0 0
    %2471 = vmatpush1.bf16.msra.mxu0 %v1849
    %2472 = vmatprep.subr.bf16.mxu0 0
    %2473 = vmatpush1.bf16.msra.mxu0 %v1850
    %2474 = vmatprep.subr.bf16.mxu0 0
    %2475 = vmatpush1.bf16.msra.mxu0 %v1851
    %2476 = vmatprep.subr.bf16.mxu0 0
    %2477 = vmatpush1.bf16.msra.mxu0 %v1852
    %2478 = vmatprep.subr.bf16.mxu0 0
    %2479 = vmatpush1.bf16.msra.mxu0 %v1853
    %2480 = vmatprep.subr.bf16.mxu0 0
    %2481 = vmatpush1.bf16.msra.mxu0 %v1854
    %2482 = vmatprep.subr.bf16.mxu0 0
    %2483 = vmatpush1.bf16.msra.mxu0 %v1855
    %2484 = vmatprep.subr.bf16.mxu0 0
    %2485 = vmatpush1.bf16.msra.mxu0 %v1856
    %2486 = vmatprep.subr.bf16.mxu0 0
    %2487 = vmatpush1.bf16.msra.mxu0 %v1857
    %2488 = vmatprep.subr.bf16.mxu0 0
    %2489 = vmatpush1.bf16.msra.mxu0 %v1858
    %2490 = vmatprep.subr.bf16.mxu0 0
    %2491 = vmatpush1.bf16.msra.mxu0 %v1859
    %2492 = vmatprep.mubr.bf16.mxu0 %v253
    %2493 = vmatmul.mubr.bf16.gmra.mrb[0].mxu0 %v252
    %v2494 = vpop.f32.mrb[0].mxu0
    %v2495 = vadd.f32 %v2455, %v2494
    %v2496 = vpop.f32.mrb[0].mxu0
    %v2497 = vpop.f32.mrb[0].mxu0
    %v2498 = vpop.f32.mrb[0].mxu0
    %2499 = vdwg.mxu0
    %2500 = vmatprep.subr.bf16.mxu0 0
    %2501 = vmatpush1.bf16.msra.mxu0 %v1860
    %2502 = vmatprep.subr.bf16.mxu0 0
    %2503 = vmatpush1.bf16.msra.mxu0 %v1861
    %2504 = vmatprep.subr.bf16.mxu0 0
    %2505 = vmatpush1.bf16.msra.mxu0 %v1862
    %2506 = vmatprep.subr.bf16.mxu0 0
    %2507 = vmatpush1.bf16.msra.mxu0 %v1863
    %2508 = vmatprep.subr.bf16.mxu0 0
    %2509 = vmatpush1.bf16.msra.mxu0 %v1864
    %2510 = vmatprep.subr.bf16.mxu0 0
    %2511 = vmatpush1.bf16.msra.mxu0 %v1865
    %2512 = vmatprep.subr.bf16.mxu0 0
    %2513 = vmatpush1.bf16.msra.mxu0 %v1866
    %2514 = vmatprep.subr.bf16.mxu0 0
    %2515 = vmatpush1.bf16.msra.mxu0 %v1867
    %2516 = vmatprep.subr.bf16.mxu0 0
    %2517 = vmatpush1.bf16.msra.mxu0 %v1868
    %2518 = vmatprep.subr.bf16.mxu0 0
    %2519 = vmatpush1.bf16.msra.mxu0 %v1869
    %2520 = vmatprep.subr.bf16.mxu0 0
    %2521 = vmatpush1.bf16.msra.mxu0 %v1870
    %2522 = vmatprep.subr.bf16.mxu0 0
    %2523 = vmatpush1.bf16.msra.mxu0 %v1871
    %2524 = vmatprep.subr.bf16.mxu0 0
    %2525 = vmatpush1.bf16.msra.mxu0 %v1872
    %2526 = vmatprep.subr.bf16.mxu0 0
    %2527 = vmatpush1.bf16.msra.mxu0 %v1873
    %2528 = vmatprep.subr.bf16.mxu0 0
    %2529 = vmatpush1.bf16.msra.mxu0 %v1874
    %2530 = vmatprep.subr.bf16.mxu0 0
    %2531 = vmatpush1.bf16.msra.mxu0 %v1875
    %2532 = vmatprep.mubr.bf16.mxu0 %v255
    %2533 = vmatmul.mubr.bf16.gmra.mrb[0].mxu0 %v254
    %v2534 = vpop.f32.mrb[0].mxu0
    %v2535 = vadd.f32 %v2495, %v2534
    %v2536 = vpop.f32.mrb[0].mxu0
    %v2537 = vpop.f32.mrb[0].mxu0
    %v2538 = vpop.f32.mrb[0].mxu0
    %2539 = vdwg.mxu0
    %2540 = vmatprep.subr.bf16.mxu0 0
    %2541 = vmatpush1.bf16.msra.mxu0 %v1876
    %2542 = vmatprep.subr.bf16.mxu0 0
    %2543 = vmatpush1.bf16.msra.mxu0 %v1877
    %2544 = vmatprep.subr.bf16.mxu0 0
    %2545 = vmatpush1.bf16.msra.mxu0 %v1878
    %2546 = vmatprep.subr.bf16.mxu0 0
    %2547 = vmatpush1.bf16.msra.mxu0 %v1879
    %2548 = vmatprep.subr.bf16.mxu0 0
    %2549 = vmatpush1.bf16.msra.mxu0 %v1880
    %2550 = vmatprep.subr.bf16.mxu0 0
    %2551 = vmatpush1.bf16.msra.mxu0 %v1881
    %2552 = vmatprep.subr.bf16.mxu0 0
    %2553 = vmatpush1.bf16.msra.mxu0 %v1882
    %2554 = vmatprep.subr.bf16.mxu0 0
    %2555 = vmatpush1.bf16.msra.mxu0 %v1883
    %2556 = vmatprep.subr.bf16.mxu0 0
    %2557 = vmatpush1.bf16.msra.mxu0 %v1884
    %2558 = vmatprep.subr.bf16.mxu0 0
    %2559 = vmatpush1.bf16.msra.mxu0 %v1885
    %2560 = vmatprep.subr.bf16.mxu0 0
    %2561 = vmatpush1.bf16.msra.mxu0 %v1886
    %2562 = vmatprep.subr.bf16.mxu0 0
    %2563 = vmatpush1.bf16.msra.mxu0 %v1887
    %2564 = vmatprep.subr.bf16.mxu0 0
    %2565 = vmatpush1.bf16.msra.mxu0 %v1888
    %2566 = vmatprep.subr.bf16.mxu0 0
    %2567 = vmatpush1.bf16.msra.mxu0 %v1889
    %2568 = vmatprep.subr.bf16.mxu0 0
    %2569 = vmatpush1.bf16.msra.mxu0 %v1890
    %2570 = vmatprep.subr.bf16.mxu0 0
    %2571 = vmatpush1.bf16.msra.mxu0 %v1891
    %2572 = vmatprep.mubr.bf16.mxu0 %v257
    %2573 = vmatmul.mubr.bf16.gmra.mrb[0].mxu0 %v256
    %v2574 = vpop.f32.mrb[0].mxu0
    %v2575 = vadd.f32 %v2535, %v2574
    %v2576 = vpop.f32.mrb[0].mxu0
    %v2577 = vpop.f32.mrb[0].mxu0
    %v2578 = vpop.f32.mrb[0].mxu0
    %2579 = vdwg.mxu0
    %2580 = vmatprep.subr.bf16.mxu0 0
    %2581 = vmatpush1.bf16.msra.mxu0 %v1892
    %2582 = vmatprep.subr.bf16.mxu0 0
    %2583 = vmatpush1.bf16.msra.mxu0 %v1893
    %2584 = vmatprep.subr.bf16.mxu0 0
    %2585 = vmatpush1.bf16.msra.mxu0 %v1894
    %2586 = vmatprep.subr.bf16.mxu0 0
    %2587 = vmatpush1.bf16.msra.mxu0 %v1895
    %2588 = vmatprep.subr.bf16.mxu0 0
    %2589 = vmatpush1.bf16.msra.mxu0 %v1896
    %2590 = vmatprep.subr.bf16.mxu0 0
    %2591 = vmatpush1.bf16.msra.mxu0 %v1897
    %2592 = vmatprep.subr.bf16.mxu0 0
    %2593 = vmatpush1.bf16.msra.mxu0 %v1898
    %2594 = vmatprep.subr.bf16.mxu0 0
    %2595 = vmatpush1.bf16.msra.mxu0 %v1899
    %2596 = vmatprep.subr.bf16.mxu0 0
    %2597 = vmatpush1.bf16.msra.mxu0 %v1900
    %2598 = vmatprep.subr.bf16.mxu0 0
    %2599 = vmatpush1.bf16.msra.mxu0 %v1901
    %2600 = vmatprep.subr.bf16.mxu0 0
    %2601 = vmatpush1.bf16.msra.mxu0 %v1902
    %2602 = vmatprep.subr.bf16.mxu0 0
    %2603 = vmatpush1.bf16.msra.mxu0 %v1903
    %2604 = vmatprep.subr.bf16.mxu0 0
    %2605 = vmatpush1.bf16.msra.mxu0 %v1904
    %2606 = vmatprep.subr.bf16.mxu0 0
    %2607 = vmatpush1.bf16.msra.mxu0 %v1905
    %2608 = vmatprep.subr.bf16.mxu0 0
    %2609 = vmatpush1.bf16.msra.mxu0 %v1906
    %2610 = vmatprep.subr.bf16.mxu0 0
    %2611 = vmatpush1.bf16.msra.mxu0 %v1907
    %2612 = vmatprep.mubr.bf16.mxu0 %v259
    %2613 = vmatmul.mubr.bf16.gmra.mrb[0].mxu0 %v258
    %v2614 = vpop.f32.mrb[0].mxu0
    %v2615 = vadd.f32 %v2575, %v2614
    %v2616 = vpop.f32.mrb[0].mxu0
    %v2617 = vpop.f32.mrb[0].mxu0
    %v2618 = vpop.f32.mrb[0].mxu0
    %2619 = vdwg.mxu0
    %2620 = vmatprep.subr.bf16.mxu0 0
    %2621 = vmatpush1.bf16.msra.mxu0 %v1908
    %2622 = vmatprep.subr.bf16.mxu0 0
    %2623 = vmatpush1.bf16.msra.mxu0 %v1909
    %2624 = vmatprep.subr.bf16.mxu0 0
    %2625 = vmatpush1.bf16.msra.mxu0 %v1910
    %2626 = vmatprep.subr.bf16.mxu0 0
    %2627 = vmatpush1.bf16.msra.mxu0 %v1911
    %2628 = vmatprep.subr.bf16.mxu0 0
    %2629 = vmatpush1.bf16.msra.mxu0 %v1912
    %2630 = vmatprep.subr.bf16.mxu0 0
    %2631 = vmatpush1.bf16.msra.mxu0 %v1913
    %2632 = vmatprep.subr.bf16.mxu0 0
    %2633 = vmatpush1.bf16.msra.mxu0 %v1914
    %2634 = vmatprep.subr.bf16.mxu0 0
    %2635 = vmatpush1.bf16.msra.mxu0 %v1915
    %2636 = vmatprep.subr.bf16.mxu0 0
    %2637 = vmatpush1.bf16.msra.mxu0 %v1916
    %2638 = vmatprep.subr.bf16.mxu0 0
    %2639 = vmatpush1.bf16.msra.mxu0 %v1917
    %2640 = vmatprep.subr.bf16.mxu0 0
    %2641 = vmatpush1.bf16.msra.mxu0 %v1918
    %2642 = vmatprep.subr.bf16.mxu0 0
    %2643 = vmatpush1.bf16.msra.mxu0 %v1919
    %2644 = vmatprep.subr.bf16.mxu0 0
    %2645 = vmatpush1.bf16.msra.mxu0 %v1920
    %2646 = vmatprep.subr.bf16.mxu0 0
    %2647 = vmatpush1.bf16.msra.mxu0 %v1921
    %2648 = vmatprep.subr.bf16.mxu0 0
    %2649 = vmatpush1.bf16.msra.mxu0 %v1922
    %2650 = vmatprep.subr.bf16.mxu0 0
    %2651 = vmatpush1.bf16.msra.mxu0 %v1923
    %2652 = vmatprep.mubr.bf16.mxu0 %v261
    %2653 = vmatmul.mubr.bf16.gmra.mrb[0].mxu0 %v260
    %v2654 = vpop.f32.mrb[0].mxu0
    %v2655 = vadd.f32 %v2615, %v2654
    %v2656 = vpop.f32.mrb[0].mxu0
    %v2657 = vpop.f32.mrb[0].mxu0
    %v2658 = vpop.f32.mrb[0].mxu0
    %2659 = vdwg.mxu0
    %2660 = vmatprep.subr.bf16.mxu0 0
    %2661 = vmatpush1.bf16.msra.mxu0 %v1924
    %2662 = vmatprep.subr.bf16.mxu0 0
    %2663 = vmatpush1.bf16.msra.mxu0 %v1925
    %2664 = vmatprep.subr.bf16.mxu0 0
    %2665 = vmatpush1.bf16.msra.mxu0 %v1926
    %2666 = vmatprep.subr.bf16.mxu0 0
    %2667 = vmatpush1.bf16.msra.mxu0 %v1927
    %2668 = vmatprep.subr.bf16.mxu0 0
    %2669 = vmatpush1.bf16.msra.mxu0 %v1928
    %2670 = vmatprep.subr.bf16.mxu0 0
    %2671 = vmatpush1.bf16.msra.mxu0 %v1929
    %2672 = vmatprep.subr.bf16.mxu0 0
    %2673 = vmatpush1.bf16.msra.mxu0 %v1930
    %2674 = vmatprep.subr.bf16.mxu0 0
    %2675 = vmatpush1.bf16.msra.mxu0 %v1931
    %2676 = vmatprep.subr.bf16.mxu0 0
    %2677 = vmatpush1.bf16.msra.mxu0 %v1932
    %2678 = vmatprep.subr.bf16.mxu0 0
    %2679 = vmatpush1.bf16.msra.mxu0 %v1933
    %2680 = vmatprep.subr.bf16.mxu0 0
    %2681 = vmatpush1.bf16.msra.mxu0 %v1934
    %2682 = vmatprep.subr.bf16.mxu0 0
    %2683 = vmatpush1.bf16.msra.mxu0 %v1935
    %2684 = vmatprep.subr.bf16.mxu0 0
    %2685 = vmatpush1.bf16.msra.mxu0 %v1936
    %2686 = vmatprep.subr.bf16.mxu0 0
    %2687 = vmatpush1.bf16.msra.mxu0 %v1937
    %2688 = vmatprep.subr.bf16.mxu0 0
    %2689 = vmatpush1.bf16.msra.mxu0 %v1938
    %2690 = vmatprep.subr.bf16.mxu0 0
    %2691 = vmatpush1.bf16.msra.mxu0 %v1939
    %2692 = vmatprep.mubr.bf16.mxu0 %v263
    %2693 = vmatmul.mubr.bf16.gmra.mrb[0].mxu0 %v262
    %v2694 = vpop.f32.mrb[0].mxu0
    %v2695 = vadd.f32 %v2655, %v2694
    %v2696 = vpop.f32.mrb[0].mxu0
    %v2697 = vpop.f32.mrb[0].mxu0
    %v2698 = vpop.f32.mrb[0].mxu0
    %2699 = vdwg.mxu0
    %2700 = vmatprep.subr.bf16.mxu0 0
    %2701 = vmatpush1.bf16.msra.mxu0 %v1940
    %2702 = vmatprep.subr.bf16.mxu0 0
    %2703 = vmatpush1.bf16.msra.mxu0 %v1941
    %2704 = vmatprep.subr.bf16.mxu0 0
    %2705 = vmatpush1.bf16.msra.mxu0 %v1942
    %2706 = vmatprep.subr.bf16.mxu0 0
    %2707 = vmatpush1.bf16.msra.mxu0 %v1943
    %2708 = vmatprep.subr.bf16.mxu0 0
    %2709 = vmatpush1.bf16.msra.mxu0 %v1944
    %2710 = vmatprep.subr.bf16.mxu0 0
    %2711 = vmatpush1.bf16.msra.mxu0 %v1945
    %2712 = vmatprep.subr.bf16.mxu0 0
    %2713 = vmatpush1.bf16.msra.mxu0 %v1946
    %2714 = vmatprep.subr.bf16.mxu0 0
    %2715 = vmatpush1.bf16.msra.mxu0 %v1947
    %2716 = vmatprep.subr.bf16.mxu0 0
    %2717 = vmatpush1.bf16.msra.mxu0 %v1948
    %2718 = vmatprep.subr.bf16.mxu0 0
    %2719 = vmatpush1.bf16.msra.mxu0 %v1949
    %2720 = vmatprep.subr.bf16.mxu0 0
    %2721 = vmatpush1.bf16.msra.mxu0 %v1950
    %2722 = vmatprep.subr.bf16.mxu0 0
    %2723 = vmatpush1.bf16.msra.mxu0 %v1951
    %2724 = vmatprep.subr.bf16.mxu0 0
    %2725 = vmatpush1.bf16.msra.mxu0 %v1952
    %2726 = vmatprep.subr.bf16.mxu0 0
    %2727 = vmatpush1.bf16.msra.mxu0 %v1953
    %2728 = vmatprep.subr.bf16.mxu0 0
    %2729 = vmatpush1.bf16.msra.mxu0 %v1954
    %2730 = vmatprep.subr.bf16.mxu0 0
    %2731 = vmatpush1.bf16.msra.mxu0 %v1955
    %2732 = vmatprep.mubr.bf16.mxu0 %v265
    %2733 = vmatmul.mubr.bf16.gmra.mrb[0].mxu0 %v264
    %v2734 = vpop.f32.mrb[0].mxu0
    %v2735 = vadd.f32 %v2695, %v2734
    %v2736 = vpop.f32.mrb[0].mxu0
    %v2737 = vpop.f32.mrb[0].mxu0
    %v2738 = vpop.f32.mrb[0].mxu0
    %2739 = vdwg.mxu0
    %2740 = vmatprep.subr.bf16.mxu0 0
    %2741 = vmatpush1.bf16.msra.mxu0 %v1956
    %2742 = vmatprep.subr.bf16.mxu0 0
    %2743 = vmatpush1.bf16.msra.mxu0 %v1957
    %2744 = vmatprep.subr.bf16.mxu0 0
    %2745 = vmatpush1.bf16.msra.mxu0 %v1958
    %2746 = vmatprep.subr.bf16.mxu0 0
    %2747 = vmatpush1.bf16.msra.mxu0 %v1959
    %2748 = vmatprep.subr.bf16.mxu0 0
    %2749 = vmatpush1.bf16.msra.mxu0 %v1960
    %2750 = vmatprep.subr.bf16.mxu0 0
    %2751 = vmatpush1.bf16.msra.mxu0 %v1961
    %2752 = vmatprep.subr.bf16.mxu0 0
    %2753 = vmatpush1.bf16.msra.mxu0 %v1962
    %2754 = vmatprep.subr.bf16.mxu0 0
    %2755 = vmatpush1.bf16.msra.mxu0 %v1963
    %2756 = vmatprep.subr.bf16.mxu0 0
    %2757 = vmatpush1.bf16.msra.mxu0 %v1964
    %2758 = vmatprep.subr.bf16.mxu0 0
    %2759 = vmatpush1.bf16.msra.mxu0 %v1965
    %2760 = vmatprep.subr.bf16.mxu0 0
    %2761 = vmatpush1.bf16.msra.mxu0 %v1966
    %2762 = vmatprep.subr.bf16.mxu0 0
    %2763 = vmatpush1.bf16.msra.mxu0 %v1967
    %2764 = vmatprep.subr.bf16.mxu0 0
    %2765 = vmatpush1.bf16.msra.mxu0 %v1968
    %2766 = vmatprep.subr.bf16.mxu0 0
    %2767 = vmatpush1.bf16.msra.mxu0 %v1969
    %2768 = vmatprep.subr.bf16.mxu0 0
    %2769 = vmatpush1.bf16.msra.mxu0 %v1970
    %2770 = vmatprep.subr.bf16.mxu0 0
    %2771 = vmatpush1.bf16.msra.mxu0 %v1971
    %2772 = vmatprep.mubr.bf16.mxu0 %v267
    %2773 = vmatmul.mubr.bf16.gmra.mrb[0].mxu0 %v266
    %v2774 = vpop.f32.mrb[0].mxu0
    %v2775 = vadd.f32 %v2735, %v2774
    %v2776 = vpop.f32.mrb[0].mxu0
    %v2777 = vpop.f32.mrb[0].mxu0
    %v2778 = vpop.f32.mrb[0].mxu0
    %2779 = vdwg.mxu0
    %2780 = vmatprep.subr.bf16.mxu0 0
    %2781 = vmatpush1.bf16.msra.mxu0 %v1972
    %2782 = vmatprep.subr.bf16.mxu0 0
    %2783 = vmatpush1.bf16.msra.mxu0 %v1973
    %2784 = vmatprep.subr.bf16.mxu0 0
    %2785 = vmatpush1.bf16.msra.mxu0 %v1974
    %2786 = vmatprep.subr.bf16.mxu0 0
    %2787 = vmatpush1.bf16.msra.mxu0 %v1975
    %2788 = vmatprep.subr.bf16.mxu0 0
    %2789 = vmatpush1.bf16.msra.mxu0 %v1976
    %2790 = vmatprep.subr.bf16.mxu0 0
    %2791 = vmatpush1.bf16.msra.mxu0 %v1977
    %2792 = vmatprep.subr.bf16.mxu0 0
    %2793 = vmatpush1.bf16.msra.mxu0 %v1978
    %2794 = vmatprep.subr.bf16.mxu0 0
    %2795 = vmatpush1.bf16.msra.mxu0 %v1979
    %2796 = vmatprep.subr.bf16.mxu0 0
    %2797 = vmatpush1.bf16.msra.mxu0 %v1980
    %2798 = vmatprep.subr.bf16.mxu0 0
    %2799 = vmatpush1.bf16.msra.mxu0 %v1981
    %2800 = vmatprep.subr.bf16.mxu0 0
    %2801 = vmatpush1.bf16.msra.mxu0 %v1982
    %2802 = vmatprep.subr.bf16.mxu0 0
    %2803 = vmatpush1.bf16.msra.mxu0 %v1983
    %2804 = vmatprep.subr.bf16.mxu0 0
    %2805 = vmatpush1.bf16.msra.mxu0 %v1984
    %2806 = vmatprep.subr.bf16.mxu0 0
    %2807 = vmatpush1.bf16.msra.mxu0 %v1985
    %2808 = vmatprep.subr.bf16.mxu0 0
    %2809 = vmatpush1.bf16.msra.mxu0 %v1986
    %2810 = vmatprep.subr.bf16.mxu0 0
    %2811 = vmatpush1.bf16.msra.mxu0 %v1987
    %2812 = vmatprep.mubr.bf16.mxu0 %v269
    %2813 = vmatmul.mubr.bf16.gmra.mrb[0].mxu0 %v268
    %v2814 = vpop.f32.mrb[0].mxu0
    %v2815 = vadd.f32 %v2775, %v2814
    %v2816 = vpop.f32.mrb[0].mxu0
    %v2817 = vpop.f32.mrb[0].mxu0
    %v2818 = vpop.f32.mrb[0].mxu0
    %2819 = vdwg.mxu0
    %2820 = vmatprep.subr.bf16.mxu0 0
    %2821 = vmatpush1.bf16.msra.mxu0 %v1988
    %2822 = vmatprep.subr.bf16.mxu0 0
    %2823 = vmatpush1.bf16.msra.mxu0 %v1989
    %2824 = vmatprep.subr.bf16.mxu0 0
    %2825 = vmatpush1.bf16.msra.mxu0 %v1990
    %2826 = vmatprep.subr.bf16.mxu0 0
    %2827 = vmatpush1.bf16.msra.mxu0 %v1991
    %2828 = vmatprep.subr.bf16.mxu0 0
    %2829 = vmatpush1.bf16.msra.mxu0 %v1992
    %2830 = vmatprep.subr.bf16.mxu0 0
    %2831 = vmatpush1.bf16.msra.mxu0 %v1993
    %2832 = vmatprep.subr.bf16.mxu0 0
    %2833 = vmatpush1.bf16.msra.mxu0 %v1994
    %2834 = vmatprep.subr.bf16.mxu0 0
    %2835 = vmatpush1.bf16.msra.mxu0 %v1995
    %2836 = vmatprep.subr.bf16.mxu0 0
    %2837 = vmatpush1.bf16.msra.mxu0 %v1996
    %2838 = vmatprep.subr.bf16.mxu0 0
    %2839 = vmatpush1.bf16.msra.mxu0 %v1997
    %2840 = vmatprep.subr.bf16.mxu0 0
    %2841 = vmatpush1.bf16.msra.mxu0 %v1998
    %2842 = vmatprep.subr.bf16.mxu0 0
    %2843 = vmatpush1.bf16.msra.mxu0 %v1999
    %2844 = vmatprep.subr.bf16.mxu0 0
    %2845 = vmatpush1.bf16.msra.mxu0 %v2000
    %2846 = vmatprep.subr.bf16.mxu0 0
    %2847 = vmatpush1.bf16.msra.mxu0 %v2001
    %2848 = vmatprep.subr.bf16.mxu0 0
    %2849 = vmatpush1.bf16.msra.mxu0 %v2002
    %2850 = vmatprep.subr.bf16.mxu0 0
    %2851 = vmatpush1.bf16.msra.mxu0 %v2003
    %2852 = vmatprep.mubr.bf16.mxu0 %v271
    %2853 = vmatmul.mubr.bf16.gmra.mrb[0].mxu0 %v270
    %v2854 = vpop.f32.mrb[0].mxu0
    %v2855 = vadd.f32 %v2815, %v2854
    %v2856 = vpop.f32.mrb[0].mxu0
    %v2857 = vpop.f32.mrb[0].mxu0
    %v2858 = vpop.f32.mrb[0].mxu0
    %2859 = vdwg.mxu0
    %2860 = vmatprep.subr.bf16.mxu0 0
    %2861 = vmatpush1.bf16.msra.mxu0 %v2004
    %2862 = vmatprep.subr.bf16.mxu0 0
    %2863 = vmatpush1.bf16.msra.mxu0 %v2005
    %2864 = vmatprep.subr.bf16.mxu0 0
    %2865 = vmatpush1.bf16.msra.mxu0 %v2006
    %2866 = vmatprep.subr.bf16.mxu0 0
    %2867 = vmatpush1.bf16.msra.mxu0 %v2007
    %2868 = vmatprep.subr.bf16.mxu0 0
    %2869 = vmatpush1.bf16.msra.mxu0 %v2008
    %2870 = vmatprep.subr.bf16.mxu0 0
    %2871 = vmatpush1.bf16.msra.mxu0 %v2009
    %2872 = vmatprep.subr.bf16.mxu0 0
    %2873 = vmatpush1.bf16.msra.mxu0 %v2010
    %2874 = vmatprep.subr.bf16.mxu0 0
    %2875 = vmatpush1.bf16.msra.mxu0 %v2011
    %2876 = vmatprep.subr.bf16.mxu0 0
    %2877 = vmatpush1.bf16.msra.mxu0 0
    %2878 = vmatprep.subr.bf16.mxu0 0
    %2879 = vmatpush1.bf16.msra.mxu0 0
    %2880 = vmatprep.subr.bf16.mxu0 0
    %2881 = vmatpush1.bf16.msra.mxu0 0
    %2882 = vmatprep.subr.bf16.mxu0 0
    %2883 = vmatpush1.bf16.msra.mxu0 0
    %2884 = vmatprep.subr.bf16.mxu0 0
    %2885 = vmatpush1.bf16.msra.mxu0 0
    %2886 = vmatprep.subr.bf16.mxu0 0
    %2887 = vmatpush1.bf16.msra.mxu0 0
    %2888 = vmatprep.subr.bf16.mxu0 0
    %2889 = vmatpush1.bf16.msra.mxu0 0
    %2890 = vmatprep.subr.bf16.mxu0 0
    %2891 = vmatpush1.bf16.msra.mxu0 0
    %2892 = vmatprep.mubr.bf16.mxu0 0
    %2893 = vmatmul.mubr.bf16.gmra.mrb[0].mxu0 %v272
    %v2894 = vpop.f32.mrb[0].mxu0
    %v2895 = vadd.f32 %v2855, %v2894
    %v2896 = vpop.f32.mrb[0].mxu0
    %v2897 = vpop.f32.mrb[0].mxu0
    %v2898 = vpop.f32.mrb[0].mxu0
    %2899 = vdwg.mxu0
    %v2900 = vstv %s59
    %v2901 = vadd.f32 %v2895, %v2900
    %2902 = vst [vmem:[#allocation9] sm:$0x3] %v2901
    // Predicated region
    $region30: #{tpu_custom_call.1} parent=1 // pred_check
      _
    $region31: #{tpu_custom_call.1} parent=1 // pred_check_branch
      %2904 = sbr.rel (0) target = $region33
    $region32: #{tpu_custom_call.1} parent=1 // pred_region
      %s2906 = ssub.s32 32, 32
      %2907 = vsyncadd [#allocation4], %s2906
      %s2909 = sshll.u32 [#allocation9], 4
      %s2910 = int_to_ptr.vmem [resolvable:$true] %s2909
      %2912 = dma.vmem_to_hbm [thread:$0]  %s2910, 32, %s4, [#allocation4]
    $region33: #{tpu_custom_call.1} parent=1 // pred_fallthru
      _
    // Predicated region
    $region34: #{tpu_custom_call.1} parent=1 // pred_check
      _
    $region35: #{tpu_custom_call.1} parent=1 // pred_check_branch
      %2914 = sbr.rel (0) target = $region37
    $region36: #{tpu_custom_call.1} parent=1 // pred_region
      %2915 = dma.done [#allocation4], 32
    $region37: #{tpu_custom_call.1} parent=1 // pred_fallthru
      _
    %2916 = vsyncpa [#allocation3], 1
    %2917 = vsyncpa [#allocation7], 1
    %2918 = vsyncpa [#allocation4], 1
    %2919 = vsyncpa [#allocation5], 1

</llo_original>
